<compile_context>
chip_gen: v5e
topology: v5e:2x2
jax: 0.10.0
libtpu: 0.0.40
codegen_flags: <defaults>
</compile_context>

<pallas_src>
import numpy as np
import jax
import jax.numpy as jnp
from jax.experimental import pallas as pl
from jax.experimental.pallas import tpu as pltpu


def _apply_gates(gates, c, H):
    """gates: (B, 4H) f32 pre-activations with the g-block already scaled by 2.
    One full-vreg sigmoid yields all four gates; tanh(g) = 2*sigmoid(2g) - 1."""
    s = jax.nn.sigmoid(gates)                    # single EUP issue over 4H lanes
    i = s[:, 0:H]
    f = s[:, H:2 * H]
    g = 2.0 * s[:, 2 * H:3 * H] - 1.0            # tanh recovered from sigmoid
    o = s[:, 3 * H:4 * H]
    c_new = f * c + i * g
    h_new = o * jnp.tanh(c_new)                  # only remaining extra EUP op
    return h_new, c_new


def make_forecast_kernel(num_layers, seq_len, output_window, hidden_size,
                         num_features, batch):
    L, T, OW, H, F, B = (num_layers, seq_len, output_window, hidden_size,
                         num_features, batch)
    has_hi = L > 1
    bf16 = jnp.bfloat16
    f32 = jnp.float32

    def kernel(*args):
        if has_hi:
            src_ref, enc0_wih_ref, whh_ref, wih_hi_ref, bias_ref, out_ref = args
        else:
            src_ref, enc0_wih_ref, whh_ref, bias_ref, out_ref = args
            wih_hi_ref = None

        # ---- hoist every weight load out of the time loops ----
        src = src_ref[...]                       # (T*B, F) f32, time-major rows
        enc0_wih = enc0_wih_ref[...]             # (F, 4H) bf16, g-block x2
        whh = whh_ref[...]                       # (2L+1, H, 4H) bf16
        enc_whh = [whh[l] for l in range(L)]
        dec_whh = [whh[L + l] for l in range(L)]
        fc_rep = whh[2 * L]                      # (H, 4H) column-replicated fc_w
        if has_hi:
            wih_hi = wih_hi_ref[...]             # (2(L-1), H, 4H) bf16
            enc_wih_hi = [wih_hi[l] for l in range(L - 1)]
            dec_wih_hi = [wih_hi[L - 1 + l] for l in range(L - 1)]
        bias = bias_ref[...]                     # (2L+2, 4H) f32
        enc_b = [bias[l:l + 1, :] for l in range(L)]
        dec0_w = bias[L:L + 1, :]                # proj_w folded into dec0 W_ih
        dec_b = [bias[L + 1 + l:L + 2 + l, :] for l in range(L)]
        fc_b = bias[2 * L + 1:2 * L + 2, :]      # fc bias replicated over 4H

        h = [jnp.zeros((B, H), f32) for _ in range(L)]
        c = [jnp.zeros((B, H), f32) for _ in range(L)]

        # ---- encoder layer-0 input projection: one batched bf16 matmul, fully
        # off the serial dependency chain (independent of h) ----
        xw = jnp.dot(src.astype(bf16), enc0_wih,
                     preferred_element_type=f32)           # (T*B, 4H)

        # ---- encoder recurrence (statically unrolled: T, OW small) ----
        # TODO(synk): switch to lax.fori_loop(..., unroll=True) + VMEM scratch
        # for x0 if T/OW/H grow large (vreg pressure).
        for t in range(T):
            x_t = xw[t * B:(t + 1) * B, :]                  # contiguous rows
            gates = (x_t
                     + jnp.dot(h[0].astype(bf16), enc_whh[0],
                               preferred_element_type=f32)
                     + enc_b[0])
            h[0], c[0] = _apply_gates(gates, c[0], H)
            inp = h[0]
            for l in range(1, L):
                # two matmuls: h[l]@W_hh depends only on prev step -> issues early
                gates = (jnp.dot(inp.astype(bf16), enc_wih_hi[l - 1],
                                 preferred_element_type=f32)
                         + jnp.dot(h[l].astype(bf16), enc_whh[l],
                                   preferred_element_type=f32)
                         + enc_b[l])
                h[l], c[l] = _apply_gates(gates, c[l], H)
                inp = h[l]

        # ---- autoregressive decoder ----
        # decoder_input = src[:, -1:, 0:1]; keep it pre-broadcast over 4H lanes
        d0 = src[(T - 1) * B:T * B, 0:1]                    # (B, 1)
        d_bcast = jnp.broadcast_to(d0, (B, 4 * H))          # one-time XLU bcast
        preds = []
        for _ in range(OW):
            # proj(1->F) folded into decoder layer-0 W_ih: pure VPU mul, exact
            gates = (d_bcast * dec0_w
                     + jnp.dot(h[0].astype(bf16), dec_whh[0],
                               preferred_element_type=f32)
                     + dec_b[0])
            h[0], c[0] = _apply_gates(gates, c[0], H)
            inp = h[0]
            for l in range(1, L):
                gates = (jnp.dot(inp.astype(bf16), dec_wih_hi[l - 1],
                                 preferred_element_type=f32)
                         + jnp.dot(h[l].astype(bf16), dec_whh[l],
                                   preferred_element_type=f32)
                         + dec_b[l])
                h[l], c[l] = _apply_gates(gates, c[l], H)
                inp = h[l]
            # fc(H->1) + sigmoid via column-replicated weight: all 4H columns of
            # `pre` are identical, so sigmoid(pre) IS the broadcast next input
            # (no cross-lane reduce / broadcast on the serial chain).
            pre = jnp.dot(inp.astype(bf16), fc_rep,
                          preferred_element_type=f32) + fc_b
            d_bcast = jax.nn.sigmoid(pre)                   # (B, 4H)
            preds.append(d_bcast[:, 0:1])                   # pred = column 0

        # single store of the whole (B, OW) output
        out_ref[...] = jnp.concatenate(preds, axis=1)

    return kernel


def _gate_scale(H):
    # Scale the g-gate block (cols 2H:3H, gate order [i,f,g,o]) by 2 so that
    # tanh(g) can be recovered from a single full-width sigmoid in-kernel.
    return jnp.concatenate([jnp.ones((2 * H,), jnp.float32),
                            jnp.full((H,), 2.0, jnp.float32),
                            jnp.ones((H,), jnp.float32)])


def prep_kernel_params(params):
    """Host-side one-time weight prep: g-scaling, proj fold, bf16 cast, packing."""
    enc, dec = params["enc"], params["dec"]
    L = len(enc)
    H = enc[0][1].shape[0]
    s = _gate_scale(H)
    bf16 = jnp.bfloat16

    kp = {}
    # encoder layer 0 input weight, used for the batched off-chain projection
    kp["enc0_wih"] = (enc[0][0] * s).astype(bf16)                   # (F, 4H)

    # one slab of all recurrent weights + replicated fc weight
    whh_list = [enc[l][1] * s for l in range(L)] + [dec[l][1] * s for l in range(L)]
    fc_rep = jnp.tile(params["fc_w"].T, (1, 4 * H))                 # (H, 4H)
    whh_list.append(fc_rep)
    kp["whh_all"] = jnp.stack(whh_list).astype(bf16)                # (2L+1, H, 4H)

    # one slab of all layer>0 input weights (enc then dec)
    if L > 1:
        wih_list = ([enc[l][0] * s for l in range(1, L)]
                    + [dec[l][0] * s for l in range(1, L)])
        kp["wih_hi"] = jnp.stack(wih_list).astype(bf16)             # (2L-2, H, 4H)
    else:
        kp["wih_hi"] = None

    # one f32 row-slab: enc biases | dec0_w (proj fold) | dec biases | fc bias
    dec0_w = (params["proj_w"] @ dec[0][0]) * s                     # (1, 4H)
    dec0_b = (params["proj_b"] @ dec[0][0] + dec[0][2]) * s         # (1, 4H)
    rows = [enc[l][2] * s for l in range(L)]
    rows.append(dec0_w)
    rows.append(dec0_b)
    rows += [dec[l][2] * s for l in range(1, L)]
    rows.append(jnp.broadcast_to(params["fc_b"], (1, 4 * H)))
    kp["bias_all"] = jnp.concatenate(rows, axis=0).astype(jnp.float32)  # (2L+2, 4H)
    return kp


def forecastnet_forward(src, params, output_window):
    B, T, F = src.shape
    H = params["enc"][0][1].shape[0]                                # W_hh^T is (H, 4H)
    L = len(params["enc"])
    kp = prep_kernel_params(params)

    # time-major flatten on the wrapper side (free XLA transpose/reshape)
    src_tm = jnp.transpose(src, (1, 0, 2)).reshape(T * B, F)

    inputs = [src_tm, kp["enc0_wih"], kp["whh_all"]]
    if kp["wih_hi"] is not None:
        inputs.append(kp["wih_hi"])
    inputs.append(kp["bias_all"])

    kernel = make_forecast_kernel(L, T, output_window, H, F, B)
    # Tiny operands: everything lives in VMEM, gridless, latency-bound -> no
    # tiling / pipelining machinery. (If B grows on v7x, add a leading batch
    # grid axis with dimension_semantics=("parallel",) to use both TCs.)
    out = pl.pallas_call(
        kernel,
        out_shape=jax.ShapeDtypeStruct((B, output_window), jnp.float32),
        in_specs=[pl.BlockSpec(memory_space=pltpu.MemorySpace.VMEM)] * len(inputs),
        out_specs=pl.BlockSpec(memory_space=pltpu.MemorySpace.VMEM),
    )(*inputs)
    return out.reshape(B, output_window, 1)


def init_params(key, num_features, hidden_size, num_layers):
    """Deterministic synthetic parameters matching the PyTorch module's shapes."""
    F, H, L = num_features, hidden_size, num_layers
    k_lstm = 1.0 / float(np.sqrt(H))

    def u(k, shape, scale):
        return jax.random.uniform(k, shape, jnp.float32, -scale, scale)

    keys = jax.random.split(key, 8 * L + 4)
    ki = 0
    params = {"enc": [], "dec": []}
    for name in ("enc", "dec"):
        for l in range(L):
            in_size = F if l == 0 else H
            w_ih = u(keys[ki], (4 * H, in_size), k_lstm); ki += 1     # weight_ih_l{l}
            w_hh = u(keys[ki], (4 * H, H), k_lstm); ki += 1           # weight_hh_l{l}
            b_ih = u(keys[ki], (4 * H,), k_lstm); ki += 1
            b_hh = u(keys[ki], (4 * H,), k_lstm); ki += 1
            params[name].append((w_ih.T, w_hh.T, (b_ih + b_hh).reshape(1, 4 * H)))
    fc_w = u(keys[ki], (1, H), 1.0 / float(np.sqrt(H))); ki += 1      # nn.Linear(H, 1).weight
    fc_b = u(keys[ki], (1,), 1.0 / float(np.sqrt(H))); ki += 1
    proj_w = u(keys[ki], (F, 1), 1.0); ki += 1                        # nn.Linear(1, F).weight
    proj_b = u(keys[ki], (F,), 1.0); ki += 1
    params["fc_w"] = fc_w                                             # (1, H)
    params["fc_b"] = fc_b.reshape(1, 1)
    params["proj_w"] = proj_w.T                                       # (1, F)
    params["proj_b"] = proj_b.reshape(1, F)
    return params


def forecastnet_ref(src, params, output_window):
    """Pure-JAX f32 reference mirroring the PyTorch forward (unfused formulation)."""
    B, T, F = src.shape
    H = params["enc"][0][1].shape[0]
    L = len(params["enc"])

    def cell(x, h, c, wih_t, whh_t, b):
        gates = x @ wih_t + h @ whh_t + b
        i = jax.nn.sigmoid(gates[:, 0:H])
        f = jax.nn.sigmoid(gates[:, H:2 * H])
        g = jnp.tanh(gates[:, 2 * H:3 * H])
        o = jax.nn.sigmoid(gates[:, 3 * H:4 * H])
        c = f * c + i * g
        h = o * jnp.tanh(c)
        return h, c

    h = [jnp.zeros((B, H), jnp.float32) for _ in range(L)]
    c = [jnp.zeros((B, H), jnp.float32) for _ in range(L)]
    for t in range(T):
        inp = src[:, t, :]
        for l in range(L):
            h[l], c[l] = cell(inp, h[l], c[l], *params["enc"][l])
            inp = h[l]
    d = src[:, T - 1, 0:1]
    outs = []
    for _ in range(output_window):
        x = d * params["proj_w"] + params["proj_b"]
        inp = x
        for l in range(L):
            h[l], c[l] = cell(inp, h[l], c[l], *params["dec"][l])
            inp = h[l]
        pred = jax.nn.sigmoid(jnp.sum(inp * params["fc_w"], axis=1, keepdims=True)
                              + params["fc_b"])
        outs.append(pred[:, None, :])
        d = pred
    return jnp.concatenate(outs, axis=1)                              # (B, OW, 1)


if __name__ == "__main__":
    # batch, seq, num_features, hidden, layers, output_window
    B, T, F, H, L, OW = 2, 8, 4, 32, 2, 4
    key = jax.random.PRNGKey(0)
    k_src, k_par = jax.random.split(key)
    src = jax.random.normal(k_src, (B, T, F), jnp.float32)
    params = init_params(k_par, F, H, L)

    out = forecastnet_forward(src, params, OW)
    out = jax.block_until_ready(out)
    assert out.shape == (B, OW, 1) and out.dtype == jnp.float32

    ref = forecastnet_ref(src, params, OW)
    np.testing.assert_allclose(np.asarray(out), np.asarray(ref), rtol=1e-2, atol=1e-2)

    print("KERNEL_OK")
</pallas_src>

<mosaic_0001>
module attributes {stable_mosaic.version = 11 : i64} {
  func.func @kernel(%arg0: memref<16x4xf32, #tpu.memory_space<vmem>>, %arg1: memref<4x128xbf16, #tpu.memory_space<vmem>>, %arg2: memref<5x32x128xbf16, #tpu.memory_space<vmem>>, %arg3: memref<2x32x128xbf16, #tpu.memory_space<vmem>>, %arg4: memref<6x128xf32, #tpu.memory_space<vmem>>, %arg5: memref<2x4xf32, #tpu.memory_space<vmem>>) attributes {dimension_semantics = [], scalar_prefetch = 0 : i64, scratch_operands = 0 : i64, tpu.core_type = #tpu.core_type<tc>} {
    %c0 = arith.constant 0 : index
    %c0_0 = arith.constant 0 : index
    %0 = vector.load %arg0[%c0, %c0_0] : memref<16x4xf32, #tpu.memory_space<vmem>>, vector<16x4xf32>
    %c0_1 = arith.constant 0 : index
    %c0_2 = arith.constant 0 : index
    %1 = vector.load %arg1[%c0_1, %c0_2] : memref<4x128xbf16, #tpu.memory_space<vmem>>, vector<4x128xbf16>
    %c0_3 = arith.constant 0 : index
    %c0_4 = arith.constant 0 : index
    %c0_5 = arith.constant 0 : index
    %2 = vector.load %arg2[%c0_3, %c0_4, %c0_5] : memref<5x32x128xbf16, #tpu.memory_space<vmem>>, vector<5x32x128xbf16>
    %3 = vector.extract_strided_slice %2 {offsets = [0, 0, 0], sizes = [1, 32, 128], strides = [1, 1, 1]} : vector<5x32x128xbf16> to vector<1x32x128xbf16>
    %4 = vector.shape_cast %3 : vector<1x32x128xbf16> to vector<32x128xbf16>
    %5 = vector.extract_strided_slice %2 {offsets = [1, 0, 0], sizes = [1, 32, 128], strides = [1, 1, 1]} : vector<5x32x128xbf16> to vector<1x32x128xbf16>
    %6 = vector.shape_cast %5 : vector<1x32x128xbf16> to vector<32x128xbf16>
    %7 = vector.extract_strided_slice %2 {offsets = [2, 0, 0], sizes = [1, 32, 128], strides = [1, 1, 1]} : vector<5x32x128xbf16> to vector<1x32x128xbf16>
    %8 = vector.shape_cast %7 : vector<1x32x128xbf16> to vector<32x128xbf16>
    %9 = vector.extract_strided_slice %2 {offsets = [3, 0, 0], sizes = [1, 32, 128], strides = [1, 1, 1]} : vector<5x32x128xbf16> to vector<1x32x128xbf16>
    %10 = vector.shape_cast %9 : vector<1x32x128xbf16> to vector<32x128xbf16>
    %11 = vector.extract_strided_slice %2 {offsets = [4, 0, 0], sizes = [1, 32, 128], strides = [1, 1, 1]} : vector<5x32x128xbf16> to vector<1x32x128xbf16>
    %12 = vector.shape_cast %11 : vector<1x32x128xbf16> to vector<32x128xbf16>
    %c0_6 = arith.constant 0 : index
    %c0_7 = arith.constant 0 : index
    %c0_8 = arith.constant 0 : index
    %13 = vector.load %arg3[%c0_6, %c0_7, %c0_8] : memref<2x32x128xbf16, #tpu.memory_space<vmem>>, vector<2x32x128xbf16>
    %14 = vector.extract_strided_slice %13 {offsets = [0, 0, 0], sizes = [1, 32, 128], strides = [1, 1, 1]} : vector<2x32x128xbf16> to vector<1x32x128xbf16>
    %15 = vector.shape_cast %14 : vector<1x32x128xbf16> to vector<32x128xbf16>
    %16 = vector.extract_strided_slice %13 {offsets = [1, 0, 0], sizes = [1, 32, 128], strides = [1, 1, 1]} : vector<2x32x128xbf16> to vector<1x32x128xbf16>
    %17 = vector.shape_cast %16 : vector<1x32x128xbf16> to vector<32x128xbf16>
    %c0_9 = arith.constant 0 : index
    %c0_10 = arith.constant 0 : index
    %18 = vector.load %arg4[%c0_9, %c0_10] : memref<6x128xf32, #tpu.memory_space<vmem>>, vector<6x128xf32>
    %19 = vector.extract_strided_slice %18 {offsets = [0, 0], sizes = [1, 128], strides = [1, 1]} : vector<6x128xf32> to vector<1x128xf32>
    %20 = vector.extract_strided_slice %18 {offsets = [1, 0], sizes = [1, 128], strides = [1, 1]} : vector<6x128xf32> to vector<1x128xf32>
    %21 = vector.extract_strided_slice %18 {offsets = [2, 0], sizes = [1, 128], strides = [1, 1]} : vector<6x128xf32> to vector<1x128xf32>
    %22 = vector.extract_strided_slice %18 {offsets = [3, 0], sizes = [1, 128], strides = [1, 1]} : vector<6x128xf32> to vector<1x128xf32>
    %23 = vector.extract_strided_slice %18 {offsets = [4, 0], sizes = [1, 128], strides = [1, 1]} : vector<6x128xf32> to vector<1x128xf32>
    %24 = vector.extract_strided_slice %18 {offsets = [5, 0], sizes = [1, 128], strides = [1, 1]} : vector<6x128xf32> to vector<1x128xf32>
    %cst = arith.constant 0.000000e+00 : f32
    %25 = vector.broadcast %cst : f32 to vector<2x32xf32>
    %cst_11 = arith.constant 0.000000e+00 : f32
    %26 = vector.broadcast %cst_11 : f32 to vector<2x32xf32>
    %cst_12 = arith.constant 0.000000e+00 : f32
    %27 = vector.broadcast %cst_12 : f32 to vector<2x32xf32>
    %cst_13 = arith.constant 0.000000e+00 : f32
    %28 = vector.broadcast %cst_13 : f32 to vector<2x32xf32>
    %29 = arith.truncf %0 : vector<16x4xf32> to vector<16x4xbf16>
    %cst_14 = arith.constant dense<0.000000e+00> : vector<16x128xf32>
    %30 = tpu.matmul %29, %1, %cst_14 {dimension_numbers = #tpu.dot_dimension_numbers<[1], [0], [0], [1], [0, 0, 1, 1], [], []>} : vector<16x4xbf16>, vector<4x128xbf16>, vector<16x128xf32> -> vector<16x128xf32>
    %31 = vector.extract_strided_slice %30 {offsets = [0, 0], sizes = [2, 128], strides = [1, 1]} : vector<16x128xf32> to vector<2x128xf32>
    %32 = arith.truncf %25 : vector<2x32xf32> to vector<2x32xbf16>
    %cst_15 = arith.constant dense<0.000000e+00> : vector<2x128xf32>
    %33 = tpu.matmul %32, %4, %cst_15 {dimension_numbers = #tpu.dot_dimension_numbers<[1], [0], [0], [1], [0, 0, 1, 1], [], []>} : vector<2x32xbf16>, vector<32x128xbf16>, vector<2x128xf32> -> vector<2x128xf32>
    %34 = arith.addf %31, %33 : vector<2x128xf32>
    %35 = vector.broadcast %19 : vector<1x128xf32> to vector<2x128xf32>
    %36 = arith.addf %34, %35 : vector<2x128xf32>
    %37 = arith.negf %36 : vector<2x128xf32>
    %38 = math.exp %37 : vector<2x128xf32>
    %cst_16 = arith.constant 1.000000e+00 : f32
    %39 = vector.broadcast %cst_16 : f32 to vector<2x128xf32>
    %40 = arith.addf %39, %38 : vector<2x128xf32>
    %41 = arith.divf %39, %40 : vector<2x128xf32>
    %42 = vector.extract_strided_slice %41 {offsets = [0, 0], sizes = [2, 32], strides = [1, 1]} : vector<2x128xf32> to vector<2x32xf32>
    %43 = vector.extract_strided_slice %41 {offsets = [0, 32], sizes = [2, 32], strides = [1, 1]} : vector<2x128xf32> to vector<2x32xf32>
    %44 = vector.extract_strided_slice %41 {offsets = [0, 64], sizes = [2, 32], strides = [1, 1]} : vector<2x128xf32> to vector<2x32xf32>
    %cst_17 = arith.constant 2.000000e+00 : f32
    %45 = vector.broadcast %cst_17 : f32 to vector<2x32xf32>
    %46 = arith.mulf %45, %44 : vector<2x32xf32>
    %cst_18 = arith.constant 1.000000e+00 : f32
    %47 = vector.broadcast %cst_18 : f32 to vector<2x32xf32>
    %48 = arith.subf %46, %47 : vector<2x32xf32>
    %49 = vector.extract_strided_slice %41 {offsets = [0, 96], sizes = [2, 32], strides = [1, 1]} : vector<2x128xf32> to vector<2x32xf32>
    %50 = arith.mulf %43, %27 : vector<2x32xf32>
    %51 = arith.mulf %42, %48 : vector<2x32xf32>
    %52 = arith.addf %50, %51 : vector<2x32xf32>
    %53 = math.tanh %52 : vector<2x32xf32>
    %54 = arith.mulf %49, %53 : vector<2x32xf32>
    %55 = arith.truncf %54 : vector<2x32xf32> to vector<2x32xbf16>
    %cst_19 = arith.constant dense<0.000000e+00> : vector<2x128xf32>
    %56 = tpu.matmul %55, %15, %cst_19 {dimension_numbers = #tpu.dot_dimension_numbers<[1], [0], [0], [1], [0, 0, 1, 1], [], []>} : vector<2x32xbf16>, vector<32x128xbf16>, vector<2x128xf32> -> vector<2x128xf32>
    %57 = arith.truncf %26 : vector<2x32xf32> to vector<2x32xbf16>
    %cst_20 = arith.constant dense<0.000000e+00> : vector<2x128xf32>
    %58 = tpu.matmul %57, %6, %cst_20 {dimension_numbers = #tpu.dot_dimension_numbers<[1], [0], [0], [1], [0, 0, 1, 1], [], []>} : vector<2x32xbf16>, vector<32x128xbf16>, vector<2x128xf32> -> vector<2x128xf32>
    %59 = arith.addf %56, %58 : vector<2x128xf32>
    %60 = vector.broadcast %20 : vector<1x128xf32> to vector<2x128xf32>
    %61 = arith.addf %59, %60 : vector<2x128xf32>
    %62 = arith.negf %61 : vector<2x128xf32>
    %63 = math.exp %62 : vector<2x128xf32>
    %cst_21 = arith.constant 1.000000e+00 : f32
    %64 = vector.broadcast %cst_21 : f32 to vector<2x128xf32>
    %65 = arith.addf %64, %63 : vector<2x128xf32>
    %66 = arith.divf %64, %65 : vector<2x128xf32>
    %67 = vector.extract_strided_slice %66 {offsets = [0, 0], sizes = [2, 32], strides = [1, 1]} : vector<2x128xf32> to vector<2x32xf32>
    %68 = vector.extract_strided_slice %66 {offsets = [0, 32], sizes = [2, 32], strides = [1, 1]} : vector<2x128xf32> to vector<2x32xf32>
    %69 = vector.extract_strided_slice %66 {offsets = [0, 64], sizes = [2, 32], strides = [1, 1]} : vector<2x128xf32> to vector<2x32xf32>
    %cst_22 = arith.constant 2.000000e+00 : f32
    %70 = vector.broadcast %cst_22 : f32 to vector<2x32xf32>
    %71 = arith.mulf %70, %69 : vector<2x32xf32>
    %cst_23 = arith.constant 1.000000e+00 : f32
    %72 = vector.broadcast %cst_23 : f32 to vector<2x32xf32>
    %73 = arith.subf %71, %72 : vector<2x32xf32>
    %74 = vector.extract_strided_slice %66 {offsets = [0, 96], sizes = [2, 32], strides = [1, 1]} : vector<2x128xf32> to vector<2x32xf32>
    %75 = arith.mulf %68, %28 : vector<2x32xf32>
    %76 = arith.mulf %67, %73 : vector<2x32xf32>
    %77 = arith.addf %75, %76 : vector<2x32xf32>
    %78 = math.tanh %77 : vector<2x32xf32>
    %79 = arith.mulf %74, %78 : vector<2x32xf32>
    %80 = vector.extract_strided_slice %30 {offsets = [2, 0], sizes = [2, 128], strides = [1, 1]} : vector<16x128xf32> to vector<2x128xf32>
    %81 = arith.truncf %54 : vector<2x32xf32> to vector<2x32xbf16>
    %cst_24 = arith.constant dense<0.000000e+00> : vector<2x128xf32>
    %82 = tpu.matmul %81, %4, %cst_24 {dimension_numbers = #tpu.dot_dimension_numbers<[1], [0], [0], [1], [0, 0, 1, 1], [], []>} : vector<2x32xbf16>, vector<32x128xbf16>, vector<2x128xf32> -> vector<2x128xf32>
    %83 = arith.addf %80, %82 : vector<2x128xf32>
    %84 = vector.broadcast %19 : vector<1x128xf32> to vector<2x128xf32>
    %85 = arith.addf %83, %84 : vector<2x128xf32>
    %86 = arith.negf %85 : vector<2x128xf32>
    %87 = math.exp %86 : vector<2x128xf32>
    %cst_25 = arith.constant 1.000000e+00 : f32
    %88 = vector.broadcast %cst_25 : f32 to vector<2x128xf32>
    %89 = arith.addf %88, %87 : vector<2x128xf32>
    %90 = arith.divf %88, %89 : vector<2x128xf32>
    %91 = vector.extract_strided_slice %90 {offsets = [0, 0], sizes = [2, 32], strides = [1, 1]} : vector<2x128xf32> to vector<2x32xf32>
    %92 = vector.extract_strided_slice %90 {offsets = [0, 32], sizes = [2, 32], strides = [1, 1]} : vector<2x128xf32> to vector<2x32xf32>
    %93 = vector.extract_strided_slice %90 {offsets = [0, 64], sizes = [2, 32], strides = [1, 1]} : vector<2x128xf32> to vector<2x32xf32>
    %cst_26 = arith.constant 2.000000e+00 : f32
    %94 = vector.broadcast %cst_26 : f32 to vector<2x32xf32>
    %95 = arith.mulf %94, %93 : vector<2x32xf32>
    %cst_27 = arith.constant 1.000000e+00 : f32
    %96 = vector.broadcast %cst_27 : f32 to vector<2x32xf32>
    %97 = arith.subf %95, %96 : vector<2x32xf32>
    %98 = vector.extract_strided_slice %90 {offsets = [0, 96], sizes = [2, 32], strides = [1, 1]} : vector<2x128xf32> to vector<2x32xf32>
    %99 = arith.mulf %92, %52 : vector<2x32xf32>
    %100 = arith.mulf %91, %97 : vector<2x32xf32>
    %101 = arith.addf %99, %100 : vector<2x32xf32>
    %102 = math.tanh %101 : vector<2x32xf32>
    %103 = arith.mulf %98, %102 : vector<2x32xf32>
    %104 = arith.truncf %103 : vector<2x32xf32> to vector<2x32xbf16>
    %cst_28 = arith.constant dense<0.000000e+00> : vector<2x128xf32>
    %105 = tpu.matmul %104, %15, %cst_28 {dimension_numbers = #tpu.dot_dimension_numbers<[1], [0], [0], [1], [0, 0, 1, 1], [], []>} : vector<2x32xbf16>, vector<32x128xbf16>, vector<2x128xf32> -> vector<2x128xf32>
    %106 = arith.truncf %79 : vector<2x32xf32> to vector<2x32xbf16>
    %cst_29 = arith.constant dense<0.000000e+00> : vector<2x128xf32>
    %107 = tpu.matmul %106, %6, %cst_29 {dimension_numbers = #tpu.dot_dimension_numbers<[1], [0], [0], [1], [0, 0, 1, 1], [], []>} : vector<2x32xbf16>, vector<32x128xbf16>, vector<2x128xf32> -> vector<2x128xf32>
    %108 = arith.addf %105, %107 : vector<2x128xf32>
    %109 = vector.broadcast %20 : vector<1x128xf32> to vector<2x128xf32>
    %110 = arith.addf %108, %109 : vector<2x128xf32>
    %111 = arith.negf %110 : vector<2x128xf32>
    %112 = math.exp %111 : vector<2x128xf32>
    %cst_30 = arith.constant 1.000000e+00 : f32
    %113 = vector.broadcast %cst_30 : f32 to vector<2x128xf32>
    %114 = arith.addf %113, %112 : vector<2x128xf32>
    %115 = arith.divf %113, %114 : vector<2x128xf32>
    %116 = vector.extract_strided_slice %115 {offsets = [0, 0], sizes = [2, 32], strides = [1, 1]} : vector<2x128xf32> to vector<2x32xf32>
    %117 = vector.extract_strided_slice %115 {offsets = [0, 32], sizes = [2, 32], strides = [1, 1]} : vector<2x128xf32> to vector<2x32xf32>
    %118 = vector.extract_strided_slice %115 {offsets = [0, 64], sizes = [2, 32], strides = [1, 1]} : vector<2x128xf32> to vector<2x32xf32>
    %cst_31 = arith.constant 2.000000e+00 : f32
    %119 = vector.broadcast %cst_31 : f32 to vector<2x32xf32>
    %120 = arith.mulf %119, %118 : vector<2x32xf32>
    %cst_32 = arith.constant 1.000000e+00 : f32
    %121 = vector.broadcast %cst_32 : f32 to vector<2x32xf32>
    %122 = arith.subf %120, %121 : vector<2x32xf32>
    %123 = vector.extract_strided_slice %115 {offsets = [0, 96], sizes = [2, 32], strides = [1, 1]} : vector<2x128xf32> to vector<2x32xf32>
    %124 = arith.mulf %117, %77 : vector<2x32xf32>
    %125 = arith.mulf %116, %122 : vector<2x32xf32>
    %126 = arith.addf %124, %125 : vector<2x32xf32>
    %127 = math.tanh %126 : vector<2x32xf32>
    %128 = arith.mulf %123, %127 : vector<2x32xf32>
    %129 = vector.extract_strided_slice %30 {offsets = [4, 0], sizes = [2, 128], strides = [1, 1]} : vector<16x128xf32> to vector<2x128xf32>
    %130 = arith.truncf %103 : vector<2x32xf32> to vector<2x32xbf16>
    %cst_33 = arith.constant dense<0.000000e+00> : vector<2x128xf32>
    %131 = tpu.matmul %130, %4, %cst_33 {dimension_numbers = #tpu.dot_dimension_numbers<[1], [0], [0], [1], [0, 0, 1, 1], [], []>} : vector<2x32xbf16>, vector<32x128xbf16>, vector<2x128xf32> -> vector<2x128xf32>
    %132 = arith.addf %129, %131 : vector<2x128xf32>
    %133 = vector.broadcast %19 : vector<1x128xf32> to vector<2x128xf32>
    %134 = arith.addf %132, %133 : vector<2x128xf32>
    %135 = arith.negf %134 : vector<2x128xf32>
    %136 = math.exp %135 : vector<2x128xf32>
    %cst_34 = arith.constant 1.000000e+00 : f32
    %137 = vector.broadcast %cst_34 : f32 to vector<2x128xf32>
    %138 = arith.addf %137, %136 : vector<2x128xf32>
    %139 = arith.divf %137, %138 : vector<2x128xf32>
    %140 = vector.extract_strided_slice %139 {offsets = [0, 0], sizes = [2, 32], strides = [1, 1]} : vector<2x128xf32> to vector<2x32xf32>
    %141 = vector.extract_strided_slice %139 {offsets = [0, 32], sizes = [2, 32], strides = [1, 1]} : vector<2x128xf32> to vector<2x32xf32>
    %142 = vector.extract_strided_slice %139 {offsets = [0, 64], sizes = [2, 32], strides = [1, 1]} : vector<2x128xf32> to vector<2x32xf32>
    %cst_35 = arith.constant 2.000000e+00 : f32
    %143 = vector.broadcast %cst_35 : f32 to vector<2x32xf32>
    %144 = arith.mulf %143, %142 : vector<2x32xf32>
    %cst_36 = arith.constant 1.000000e+00 : f32
    %145 = vector.broadcast %cst_36 : f32 to vector<2x32xf32>
    %146 = arith.subf %144, %145 : vector<2x32xf32>
    %147 = vector.extract_strided_slice %139 {offsets = [0, 96], sizes = [2, 32], strides = [1, 1]} : vector<2x128xf32> to vector<2x32xf32>
    %148 = arith.mulf %141, %101 : vector<2x32xf32>
    %149 = arith.mulf %140, %146 : vector<2x32xf32>
    %150 = arith.addf %148, %149 : vector<2x32xf32>
    %151 = math.tanh %150 : vector<2x32xf32>
    %152 = arith.mulf %147, %151 : vector<2x32xf32>
    %153 = arith.truncf %152 : vector<2x32xf32> to vector<2x32xbf16>
    %cst_37 = arith.constant dense<0.000000e+00> : vector<2x128xf32>
    %154 = tpu.matmul %153, %15, %cst_37 {dimension_numbers = #tpu.dot_dimension_numbers<[1], [0], [0], [1], [0, 0, 1, 1], [], []>} : vector<2x32xbf16>, vector<32x128xbf16>, vector<2x128xf32> -> vector<2x128xf32>
    %155 = arith.truncf %128 : vector<2x32xf32> to vector<2x32xbf16>
    %cst_38 = arith.constant dense<0.000000e+00> : vector<2x128xf32>
    %156 = tpu.matmul %155, %6, %cst_38 {dimension_numbers = #tpu.dot_dimension_numbers<[1], [0], [0], [1], [0, 0, 1, 1], [], []>} : vector<2x32xbf16>, vector<32x128xbf16>, vector<2x128xf32> -> vector<2x128xf32>
    %157 = arith.addf %154, %156 : vector<2x128xf32>
    %158 = vector.broadcast %20 : vector<1x128xf32> to vector<2x128xf32>
    %159 = arith.addf %157, %158 : vector<2x128xf32>
    %160 = arith.negf %159 : vector<2x128xf32>
    %161 = math.exp %160 : vector<2x128xf32>
    %cst_39 = arith.constant 1.000000e+00 : f32
    %162 = vector.broadcast %cst_39 : f32 to vector<2x128xf32>
    %163 = arith.addf %162, %161 : vector<2x128xf32>
    %164 = arith.divf %162, %163 : vector<2x128xf32>
    %165 = vector.extract_strided_slice %164 {offsets = [0, 0], sizes = [2, 32], strides = [1, 1]} : vector<2x128xf32> to vector<2x32xf32>
    %166 = vector.extract_strided_slice %164 {offsets = [0, 32], sizes = [2, 32], strides = [1, 1]} : vector<2x128xf32> to vector<2x32xf32>
    %167 = vector.extract_strided_slice %164 {offsets = [0, 64], sizes = [2, 32], strides = [1, 1]} : vector<2x128xf32> to vector<2x32xf32>
    %cst_40 = arith.constant 2.000000e+00 : f32
    %168 = vector.broadcast %cst_40 : f32 to vector<2x32xf32>
    %169 = arith.mulf %168, %167 : vector<2x32xf32>
    %cst_41 = arith.constant 1.000000e+00 : f32
    %170 = vector.broadcast %cst_41 : f32 to vector<2x32xf32>
    %171 = arith.subf %169, %170 : vector<2x32xf32>
    %172 = vector.extract_strided_slice %164 {offsets = [0, 96], sizes = [2, 32], strides = [1, 1]} : vector<2x128xf32> to vector<2x32xf32>
    %173 = arith.mulf %166, %126 : vector<2x32xf32>
    %174 = arith.mulf %165, %171 : vector<2x32xf32>
    %175 = arith.addf %173, %174 : vector<2x32xf32>
    %176 = math.tanh %175 : vector<2x32xf32>
    %177 = arith.mulf %172, %176 : vector<2x32xf32>
    %178 = vector.extract_strided_slice %30 {offsets = [6, 0], sizes = [2, 128], strides = [1, 1]} : vector<16x128xf32> to vector<2x128xf32>
    %179 = arith.truncf %152 : vector<2x32xf32> to vector<2x32xbf16>
    %cst_42 = arith.constant dense<0.000000e+00> : vector<2x128xf32>
    %180 = tpu.matmul %179, %4, %cst_42 {dimension_numbers = #tpu.dot_dimension_numbers<[1], [0], [0], [1], [0, 0, 1, 1], [], []>} : vector<2x32xbf16>, vector<32x128xbf16>, vector<2x128xf32> -> vector<2x128xf32>
    %181 = arith.addf %178, %180 : vector<2x128xf32>
    %182 = vector.broadcast %19 : vector<1x128xf32> to vector<2x128xf32>
    %183 = arith.addf %181, %182 : vector<2x128xf32>
    %184 = arith.negf %183 : vector<2x128xf32>
    %185 = math.exp %184 : vector<2x128xf32>
    %cst_43 = arith.constant 1.000000e+00 : f32
    %186 = vector.broadcast %cst_43 : f32 to vector<2x128xf32>
    %187 = arith.addf %186, %185 : vector<2x128xf32>
    %188 = arith.divf %186, %187 : vector<2x128xf32>
    %189 = vector.extract_strided_slice %188 {offsets = [0, 0], sizes = [2, 32], strides = [1, 1]} : vector<2x128xf32> to vector<2x32xf32>
    %190 = vector.extract_strided_slice %188 {offsets = [0, 32], sizes = [2, 32], strides = [1, 1]} : vector<2x128xf32> to vector<2x32xf32>
    %191 = vector.extract_strided_slice %188 {offsets = [0, 64], sizes = [2, 32], strides = [1, 1]} : vector<2x128xf32> to vector<2x32xf32>
    %cst_44 = arith.constant 2.000000e+00 : f32
    %192 = vector.broadcast %cst_44 : f32 to vector<2x32xf32>
    %193 = arith.mulf %192, %191 : vector<2x32xf32>
    %cst_45 = arith.constant 1.000000e+00 : f32
    %194 = vector.broadcast %cst_45 : f32 to vector<2x32xf32>
    %195 = arith.subf %193, %194 : vector<2x32xf32>
    %196 = vector.extract_strided_slice %188 {offsets = [0, 96], sizes = [2, 32], strides = [1, 1]} : vector<2x128xf32> to vector<2x32xf32>
    %197 = arith.mulf %190, %150 : vector<2x32xf32>
    %198 = arith.mulf %189, %195 : vector<2x32xf32>
    %199 = arith.addf %197, %198 : vector<2x32xf32>
    %200 = math.tanh %199 : vector<2x32xf32>
    %201 = arith.mulf %196, %200 : vector<2x32xf32>
    %202 = arith.truncf %201 : vector<2x32xf32> to vector<2x32xbf16>
    %cst_46 = arith.constant dense<0.000000e+00> : vector<2x128xf32>
    %203 = tpu.matmul %202, %15, %cst_46 {dimension_numbers = #tpu.dot_dimension_numbers<[1], [0], [0], [1], [0, 0, 1, 1], [], []>} : vector<2x32xbf16>, vector<32x128xbf16>, vector<2x128xf32> -> vector<2x128xf32>
    %204 = arith.truncf %177 : vector<2x32xf32> to vector<2x32xbf16>
    %cst_47 = arith.constant dense<0.000000e+00> : vector<2x128xf32>
    %205 = tpu.matmul %204, %6, %cst_47 {dimension_numbers = #tpu.dot_dimension_numbers<[1], [0], [0], [1], [0, 0, 1, 1], [], []>} : vector<2x32xbf16>, vector<32x128xbf16>, vector<2x128xf32> -> vector<2x128xf32>
    %206 = arith.addf %203, %205 : vector<2x128xf32>
    %207 = vector.broadcast %20 : vector<1x128xf32> to vector<2x128xf32>
    %208 = arith.addf %206, %207 : vector<2x128xf32>
    %209 = arith.negf %208 : vector<2x128xf32>
    %210 = math.exp %209 : vector<2x128xf32>
    %cst_48 = arith.constant 1.000000e+00 : f32
    %211 = vector.broadcast %cst_48 : f32 to vector<2x128xf32>
    %212 = arith.addf %211, %210 : vector<2x128xf32>
    %213 = arith.divf %211, %212 : vector<2x128xf32>
    %214 = vector.extract_strided_slice %213 {offsets = [0, 0], sizes = [2, 32], strides = [1, 1]} : vector<2x128xf32> to vector<2x32xf32>
    %215 = vector.extract_strided_slice %213 {offsets = [0, 32], sizes = [2, 32], strides = [1, 1]} : vector<2x128xf32> to vector<2x32xf32>
    %216 = vector.extract_strided_slice %213 {offsets = [0, 64], sizes = [2, 32], strides = [1, 1]} : vector<2x128xf32> to vector<2x32xf32>
    %cst_49 = arith.constant 2.000000e+00 : f32
    %217 = vector.broadcast %cst_49 : f32 to vector<2x32xf32>
    %218 = arith.mulf %217, %216 : vector<2x32xf32>
    %cst_50 = arith.constant 1.000000e+00 : f32
    %219 = vector.broadcast %cst_50 : f32 to vector<2x32xf32>
    %220 = arith.subf %218, %219 : vector<2x32xf32>
    %221 = vector.extract_strided_slice %213 {offsets = [0, 96], sizes = [2, 32], strides = [1, 1]} : vector<2x128xf32> to vector<2x32xf32>
    %222 = arith.mulf %215, %175 : vector<2x32xf32>
    %223 = arith.mulf %214, %220 : vector<2x32xf32>
    %224 = arith.addf %222, %223 : vector<2x32xf32>
    %225 = math.tanh %224 : vector<2x32xf32>
    %226 = arith.mulf %221, %225 : vector<2x32xf32>
    %227 = vector.extract_strided_slice %30 {offsets = [8, 0], sizes = [2, 128], strides = [1, 1]} : vector<16x128xf32> to vector<2x128xf32>
    %228 = arith.truncf %201 : vector<2x32xf32> to vector<2x32xbf16>
    %cst_51 = arith.constant dense<0.000000e+00> : vector<2x128xf32>
    %229 = tpu.matmul %228, %4, %cst_51 {dimension_numbers = #tpu.dot_dimension_numbers<[1], [0], [0], [1], [0, 0, 1, 1], [], []>} : vector<2x32xbf16>, vector<32x128xbf16>, vector<2x128xf32> -> vector<2x128xf32>
    %230 = arith.addf %227, %229 : vector<2x128xf32>
    %231 = vector.broadcast %19 : vector<1x128xf32> to vector<2x128xf32>
    %232 = arith.addf %230, %231 : vector<2x128xf32>
    %233 = arith.negf %232 : vector<2x128xf32>
    %234 = math.exp %233 : vector<2x128xf32>
    %cst_52 = arith.constant 1.000000e+00 : f32
    %235 = vector.broadcast %cst_52 : f32 to vector<2x128xf32>
    %236 = arith.addf %235, %234 : vector<2x128xf32>
    %237 = arith.divf %235, %236 : vector<2x128xf32>
    %238 = vector.extract_strided_slice %237 {offsets = [0, 0], sizes = [2, 32], strides = [1, 1]} : vector<2x128xf32> to vector<2x32xf32>
    %239 = vector.extract_strided_slice %237 {offsets = [0, 32], sizes = [2, 32], strides = [1, 1]} : vector<2x128xf32> to vector<2x32xf32>
    %240 = vector.extract_strided_slice %237 {offsets = [0, 64], sizes = [2, 32], strides = [1, 1]} : vector<2x128xf32> to vector<2x32xf32>
    %cst_53 = arith.constant 2.000000e+00 : f32
    %241 = vector.broadcast %cst_53 : f32 to vector<2x32xf32>
    %242 = arith.mulf %241, %240 : vector<2x32xf32>
    %cst_54 = arith.constant 1.000000e+00 : f32
    %243 = vector.broadcast %cst_54 : f32 to vector<2x32xf32>
    %244 = arith.subf %242, %243 : vector<2x32xf32>
    %245 = vector.extract_strided_slice %237 {offsets = [0, 96], sizes = [2, 32], strides = [1, 1]} : vector<2x128xf32> to vector<2x32xf32>
    %246 = arith.mulf %239, %199 : vector<2x32xf32>
    %247 = arith.mulf %238, %244 : vector<2x32xf32>
    %248 = arith.addf %246, %247 : vector<2x32xf32>
    %249 = math.tanh %248 : vector<2x32xf32>
    %250 = arith.mulf %245, %249 : vector<2x32xf32>
    %251 = arith.truncf %250 : vector<2x32xf32> to vector<2x32xbf16>
    %cst_55 = arith.constant dense<0.000000e+00> : vector<2x128xf32>
    %252 = tpu.matmul %251, %15, %cst_55 {dimension_numbers = #tpu.dot_dimension_numbers<[1], [0], [0], [1], [0, 0, 1, 1], [], []>} : vector<2x32xbf16>, vector<32x128xbf16>, vector<2x128xf32> -> vector<2x128xf32>
    %253 = arith.truncf %226 : vector<2x32xf32> to vector<2x32xbf16>
    %cst_56 = arith.constant dense<0.000000e+00> : vector<2x128xf32>
    %254 = tpu.matmul %253, %6, %cst_56 {dimension_numbers = #tpu.dot_dimension_numbers<[1], [0], [0], [1], [0, 0, 1, 1], [], []>} : vector<2x32xbf16>, vector<32x128xbf16>, vector<2x128xf32> -> vector<2x128xf32>
    %255 = arith.addf %252, %254 : vector<2x128xf32>
    %256 = vector.broadcast %20 : vector<1x128xf32> to vector<2x128xf32>
    %257 = arith.addf %255, %256 : vector<2x128xf32>
    %258 = arith.negf %257 : vector<2x128xf32>
    %259 = math.exp %258 : vector<2x128xf32>
    %cst_57 = arith.constant 1.000000e+00 : f32
    %260 = vector.broadcast %cst_57 : f32 to vector<2x128xf32>
    %261 = arith.addf %260, %259 : vector<2x128xf32>
    %262 = arith.divf %260, %261 : vector<2x128xf32>
    %263 = vector.extract_strided_slice %262 {offsets = [0, 0], sizes = [2, 32], strides = [1, 1]} : vector<2x128xf32> to vector<2x32xf32>
    %264 = vector.extract_strided_slice %262 {offsets = [0, 32], sizes = [2, 32], strides = [1, 1]} : vector<2x128xf32> to vector<2x32xf32>
    %265 = vector.extract_strided_slice %262 {offsets = [0, 64], sizes = [2, 32], strides = [1, 1]} : vector<2x128xf32> to vector<2x32xf32>
    %cst_58 = arith.constant 2.000000e+00 : f32
    %266 = vector.broadcast %cst_58 : f32 to vector<2x32xf32>
    %267 = arith.mulf %266, %265 : vector<2x32xf32>
    %cst_59 = arith.constant 1.000000e+00 : f32
    %268 = vector.broadcast %cst_59 : f32 to vector<2x32xf32>
    %269 = arith.subf %267, %268 : vector<2x32xf32>
    %270 = vector.extract_strided_slice %262 {offsets = [0, 96], sizes = [2, 32], strides = [1, 1]} : vector<2x128xf32> to vector<2x32xf32>
    %271 = arith.mulf %264, %224 : vector<2x32xf32>
    %272 = arith.mulf %263, %269 : vector<2x32xf32>
    %273 = arith.addf %271, %272 : vector<2x32xf32>
    %274 = math.tanh %273 : vector<2x32xf32>
    %275 = arith.mulf %270, %274 : vector<2x32xf32>
    %276 = vector.extract_strided_slice %30 {offsets = [10, 0], sizes = [2, 128], strides = [1, 1]} : vector<16x128xf32> to vector<2x128xf32>
    %277 = arith.truncf %250 : vector<2x32xf32> to vector<2x32xbf16>
    %cst_60 = arith.constant dense<0.000000e+00> : vector<2x128xf32>
    %278 = tpu.matmul %277, %4, %cst_60 {dimension_numbers = #tpu.dot_dimension_numbers<[1], [0], [0], [1], [0, 0, 1, 1], [], []>} : vector<2x32xbf16>, vector<32x128xbf16>, vector<2x128xf32> -> vector<2x128xf32>
    %279 = arith.addf %276, %278 : vector<2x128xf32>
    %280 = vector.broadcast %19 : vector<1x128xf32> to vector<2x128xf32>
    %281 = arith.addf %279, %280 : vector<2x128xf32>
    %282 = arith.negf %281 : vector<2x128xf32>
    %283 = math.exp %282 : vector<2x128xf32>
    %cst_61 = arith.constant 1.000000e+00 : f32
    %284 = vector.broadcast %cst_61 : f32 to vector<2x128xf32>
    %285 = arith.addf %284, %283 : vector<2x128xf32>
    %286 = arith.divf %284, %285 : vector<2x128xf32>
    %287 = vector.extract_strided_slice %286 {offsets = [0, 0], sizes = [2, 32], strides = [1, 1]} : vector<2x128xf32> to vector<2x32xf32>
    %288 = vector.extract_strided_slice %286 {offsets = [0, 32], sizes = [2, 32], strides = [1, 1]} : vector<2x128xf32> to vector<2x32xf32>
    %289 = vector.extract_strided_slice %286 {offsets = [0, 64], sizes = [2, 32], strides = [1, 1]} : vector<2x128xf32> to vector<2x32xf32>
    %cst_62 = arith.constant 2.000000e+00 : f32
    %290 = vector.broadcast %cst_62 : f32 to vector<2x32xf32>
    %291 = arith.mulf %290, %289 : vector<2x32xf32>
    %cst_63 = arith.constant 1.000000e+00 : f32
    %292 = vector.broadcast %cst_63 : f32 to vector<2x32xf32>
    %293 = arith.subf %291, %292 : vector<2x32xf32>
    %294 = vector.extract_strided_slice %286 {offsets = [0, 96], sizes = [2, 32], strides = [1, 1]} : vector<2x128xf32> to vector<2x32xf32>
    %295 = arith.mulf %288, %248 : vector<2x32xf32>
    %296 = arith.mulf %287, %293 : vector<2x32xf32>
    %297 = arith.addf %295, %296 : vector<2x32xf32>
    %298 = math.tanh %297 : vector<2x32xf32>
    %299 = arith.mulf %294, %298 : vector<2x32xf32>
    %300 = arith.truncf %299 : vector<2x32xf32> to vector<2x32xbf16>
    %cst_64 = arith.constant dense<0.000000e+00> : vector<2x128xf32>
    %301 = tpu.matmul %300, %15, %cst_64 {dimension_numbers = #tpu.dot_dimension_numbers<[1], [0], [0], [1], [0, 0, 1, 1], [], []>} : vector<2x32xbf16>, vector<32x128xbf16>, vector<2x128xf32> -> vector<2x128xf32>
    %302 = arith.truncf %275 : vector<2x32xf32> to vector<2x32xbf16>
    %cst_65 = arith.constant dense<0.000000e+00> : vector<2x128xf32>
    %303 = tpu.matmul %302, %6, %cst_65 {dimension_numbers = #tpu.dot_dimension_numbers<[1], [0], [0], [1], [0, 0, 1, 1], [], []>} : vector<2x32xbf16>, vector<32x128xbf16>, vector<2x128xf32> -> vector<2x128xf32>
    %304 = arith.addf %301, %303 : vector<2x128xf32>
    %305 = vector.broadcast %20 : vector<1x128xf32> to vector<2x128xf32>
    %306 = arith.addf %304, %305 : vector<2x128xf32>
    %307 = arith.negf %306 : vector<2x128xf32>
    %308 = math.exp %307 : vector<2x128xf32>
    %cst_66 = arith.constant 1.000000e+00 : f32
    %309 = vector.broadcast %cst_66 : f32 to vector<2x128xf32>
    %310 = arith.addf %309, %308 : vector<2x128xf32>
    %311 = arith.divf %309, %310 : vector<2x128xf32>
    %312 = vector.extract_strided_slice %311 {offsets = [0, 0], sizes = [2, 32], strides = [1, 1]} : vector<2x128xf32> to vector<2x32xf32>
    %313 = vector.extract_strided_slice %311 {offsets = [0, 32], sizes = [2, 32], strides = [1, 1]} : vector<2x128xf32> to vector<2x32xf32>
    %314 = vector.extract_strided_slice %311 {offsets = [0, 64], sizes = [2, 32], strides = [1, 1]} : vector<2x128xf32> to vector<2x32xf32>
    %cst_67 = arith.constant 2.000000e+00 : f32
    %315 = vector.broadcast %cst_67 : f32 to vector<2x32xf32>
    %316 = arith.mulf %315, %314 : vector<2x32xf32>
    %cst_68 = arith.constant 1.000000e+00 : f32
    %317 = vector.broadcast %cst_68 : f32 to vector<2x32xf32>
    %318 = arith.subf %316, %317 : vector<2x32xf32>
    %319 = vector.extract_strided_slice %311 {offsets = [0, 96], sizes = [2, 32], strides = [1, 1]} : vector<2x128xf32> to vector<2x32xf32>
    %320 = arith.mulf %313, %273 : vector<2x32xf32>
    %321 = arith.mulf %312, %318 : vector<2x32xf32>
    %322 = arith.addf %320, %321 : vector<2x32xf32>
    %323 = math.tanh %322 : vector<2x32xf32>
    %324 = arith.mulf %319, %323 : vector<2x32xf32>
    %325 = vector.extract_strided_slice %30 {offsets = [12, 0], sizes = [2, 128], strides = [1, 1]} : vector<16x128xf32> to vector<2x128xf32>
    %326 = arith.truncf %299 : vector<2x32xf32> to vector<2x32xbf16>
    %cst_69 = arith.constant dense<0.000000e+00> : vector<2x128xf32>
    %327 = tpu.matmul %326, %4, %cst_69 {dimension_numbers = #tpu.dot_dimension_numbers<[1], [0], [0], [1], [0, 0, 1, 1], [], []>} : vector<2x32xbf16>, vector<32x128xbf16>, vector<2x128xf32> -> vector<2x128xf32>
    %328 = arith.addf %325, %327 : vector<2x128xf32>
    %329 = vector.broadcast %19 : vector<1x128xf32> to vector<2x128xf32>
    %330 = arith.addf %328, %329 : vector<2x128xf32>
    %331 = arith.negf %330 : vector<2x128xf32>
    %332 = math.exp %331 : vector<2x128xf32>
    %cst_70 = arith.constant 1.000000e+00 : f32
    %333 = vector.broadcast %cst_70 : f32 to vector<2x128xf32>
    %334 = arith.addf %333, %332 : vector<2x128xf32>
    %335 = arith.divf %333, %334 : vector<2x128xf32>
    %336 = vector.extract_strided_slice %335 {offsets = [0, 0], sizes = [2, 32], strides = [1, 1]} : vector<2x128xf32> to vector<2x32xf32>
    %337 = vector.extract_strided_slice %335 {offsets = [0, 32], sizes = [2, 32], strides = [1, 1]} : vector<2x128xf32> to vector<2x32xf32>
    %338 = vector.extract_strided_slice %335 {offsets = [0, 64], sizes = [2, 32], strides = [1, 1]} : vector<2x128xf32> to vector<2x32xf32>
    %cst_71 = arith.constant 2.000000e+00 : f32
    %339 = vector.broadcast %cst_71 : f32 to vector<2x32xf32>
    %340 = arith.mulf %339, %338 : vector<2x32xf32>
    %cst_72 = arith.constant 1.000000e+00 : f32
    %341 = vector.broadcast %cst_72 : f32 to vector<2x32xf32>
    %342 = arith.subf %340, %341 : vector<2x32xf32>
    %343 = vector.extract_strided_slice %335 {offsets = [0, 96], sizes = [2, 32], strides = [1, 1]} : vector<2x128xf32> to vector<2x32xf32>
    %344 = arith.mulf %337, %297 : vector<2x32xf32>
    %345 = arith.mulf %336, %342 : vector<2x32xf32>
    %346 = arith.addf %344, %345 : vector<2x32xf32>
    %347 = math.tanh %346 : vector<2x32xf32>
    %348 = arith.mulf %343, %347 : vector<2x32xf32>
    %349 = arith.truncf %348 : vector<2x32xf32> to vector<2x32xbf16>
    %cst_73 = arith.constant dense<0.000000e+00> : vector<2x128xf32>
    %350 = tpu.matmul %349, %15, %cst_73 {dimension_numbers = #tpu.dot_dimension_numbers<[1], [0], [0], [1], [0, 0, 1, 1], [], []>} : vector<2x32xbf16>, vector<32x128xbf16>, vector<2x128xf32> -> vector<2x128xf32>
    %351 = arith.truncf %324 : vector<2x32xf32> to vector<2x32xbf16>
    %cst_74 = arith.constant dense<0.000000e+00> : vector<2x128xf32>
    %352 = tpu.matmul %351, %6, %cst_74 {dimension_numbers = #tpu.dot_dimension_numbers<[1], [0], [0], [1], [0, 0, 1, 1], [], []>} : vector<2x32xbf16>, vector<32x128xbf16>, vector<2x128xf32> -> vector<2x128xf32>
    %353 = arith.addf %350, %352 : vector<2x128xf32>
    %354 = vector.broadcast %20 : vector<1x128xf32> to vector<2x128xf32>
    %355 = arith.addf %353, %354 : vector<2x128xf32>
    %356 = arith.negf %355 : vector<2x128xf32>
    %357 = math.exp %356 : vector<2x128xf32>
    %cst_75 = arith.constant 1.000000e+00 : f32
    %358 = vector.broadcast %cst_75 : f32 to vector<2x128xf32>
    %359 = arith.addf %358, %357 : vector<2x128xf32>
    %360 = arith.divf %358, %359 : vector<2x128xf32>
    %361 = vector.extract_strided_slice %360 {offsets = [0, 0], sizes = [2, 32], strides = [1, 1]} : vector<2x128xf32> to vector<2x32xf32>
    %362 = vector.extract_strided_slice %360 {offsets = [0, 32], sizes = [2, 32], strides = [1, 1]} : vector<2x128xf32> to vector<2x32xf32>
    %363 = vector.extract_strided_slice %360 {offsets = [0, 64], sizes = [2, 32], strides = [1, 1]} : vector<2x128xf32> to vector<2x32xf32>
    %cst_76 = arith.constant 2.000000e+00 : f32
    %364 = vector.broadcast %cst_76 : f32 to vector<2x32xf32>
    %365 = arith.mulf %364, %363 : vector<2x32xf32>
    %cst_77 = arith.constant 1.000000e+00 : f32
    %366 = vector.broadcast %cst_77 : f32 to vector<2x32xf32>
    %367 = arith.subf %365, %366 : vector<2x32xf32>
    %368 = vector.extract_strided_slice %360 {offsets = [0, 96], sizes = [2, 32], strides = [1, 1]} : vector<2x128xf32> to vector<2x32xf32>
    %369 = arith.mulf %362, %322 : vector<2x32xf32>
    %370 = arith.mulf %361, %367 : vector<2x32xf32>
    %371 = arith.addf %369, %370 : vector<2x32xf32>
    %372 = math.tanh %371 : vector<2x32xf32>
    %373 = arith.mulf %368, %372 : vector<2x32xf32>
    %374 = vector.extract_strided_slice %30 {offsets = [14, 0], sizes = [2, 128], strides = [1, 1]} : vector<16x128xf32> to vector<2x128xf32>
    %375 = arith.truncf %348 : vector<2x32xf32> to vector<2x32xbf16>
    %cst_78 = arith.constant dense<0.000000e+00> : vector<2x128xf32>
    %376 = tpu.matmul %375, %4, %cst_78 {dimension_numbers = #tpu.dot_dimension_numbers<[1], [0], [0], [1], [0, 0, 1, 1], [], []>} : vector<2x32xbf16>, vector<32x128xbf16>, vector<2x128xf32> -> vector<2x128xf32>
    %377 = arith.addf %374, %376 : vector<2x128xf32>
    %378 = vector.broadcast %19 : vector<1x128xf32> to vector<2x128xf32>
    %379 = arith.addf %377, %378 : vector<2x128xf32>
    %380 = arith.negf %379 : vector<2x128xf32>
    %381 = math.exp %380 : vector<2x128xf32>
    %cst_79 = arith.constant 1.000000e+00 : f32
    %382 = vector.broadcast %cst_79 : f32 to vector<2x128xf32>
    %383 = arith.addf %382, %381 : vector<2x128xf32>
    %384 = arith.divf %382, %383 : vector<2x128xf32>
    %385 = vector.extract_strided_slice %384 {offsets = [0, 0], sizes = [2, 32], strides = [1, 1]} : vector<2x128xf32> to vector<2x32xf32>
    %386 = vector.extract_strided_slice %384 {offsets = [0, 32], sizes = [2, 32], strides = [1, 1]} : vector<2x128xf32> to vector<2x32xf32>
    %387 = vector.extract_strided_slice %384 {offsets = [0, 64], sizes = [2, 32], strides = [1, 1]} : vector<2x128xf32> to vector<2x32xf32>
    %cst_80 = arith.constant 2.000000e+00 : f32
    %388 = vector.broadcast %cst_80 : f32 to vector<2x32xf32>
    %389 = arith.mulf %388, %387 : vector<2x32xf32>
    %cst_81 = arith.constant 1.000000e+00 : f32
    %390 = vector.broadcast %cst_81 : f32 to vector<2x32xf32>
    %391 = arith.subf %389, %390 : vector<2x32xf32>
    %392 = vector.extract_strided_slice %384 {offsets = [0, 96], sizes = [2, 32], strides = [1, 1]} : vector<2x128xf32> to vector<2x32xf32>
    %393 = arith.mulf %386, %346 : vector<2x32xf32>
    %394 = arith.mulf %385, %391 : vector<2x32xf32>
    %395 = arith.addf %393, %394 : vector<2x32xf32>
    %396 = math.tanh %395 : vector<2x32xf32>
    %397 = arith.mulf %392, %396 : vector<2x32xf32>
    %398 = arith.truncf %397 : vector<2x32xf32> to vector<2x32xbf16>
    %cst_82 = arith.constant dense<0.000000e+00> : vector<2x128xf32>
    %399 = tpu.matmul %398, %15, %cst_82 {dimension_numbers = #tpu.dot_dimension_numbers<[1], [0], [0], [1], [0, 0, 1, 1], [], []>} : vector<2x32xbf16>, vector<32x128xbf16>, vector<2x128xf32> -> vector<2x128xf32>
    %400 = arith.truncf %373 : vector<2x32xf32> to vector<2x32xbf16>
    %cst_83 = arith.constant dense<0.000000e+00> : vector<2x128xf32>
    %401 = tpu.matmul %400, %6, %cst_83 {dimension_numbers = #tpu.dot_dimension_numbers<[1], [0], [0], [1], [0, 0, 1, 1], [], []>} : vector<2x32xbf16>, vector<32x128xbf16>, vector<2x128xf32> -> vector<2x128xf32>
    %402 = arith.addf %399, %401 : vector<2x128xf32>
    %403 = vector.broadcast %20 : vector<1x128xf32> to vector<2x128xf32>
    %404 = arith.addf %402, %403 : vector<2x128xf32>
    %405 = arith.negf %404 : vector<2x128xf32>
    %406 = math.exp %405 : vector<2x128xf32>
    %cst_84 = arith.constant 1.000000e+00 : f32
    %407 = vector.broadcast %cst_84 : f32 to vector<2x128xf32>
    %408 = arith.addf %407, %406 : vector<2x128xf32>
    %409 = arith.divf %407, %408 : vector<2x128xf32>
    %410 = vector.extract_strided_slice %409 {offsets = [0, 0], sizes = [2, 32], strides = [1, 1]} : vector<2x128xf32> to vector<2x32xf32>
    %411 = vector.extract_strided_slice %409 {offsets = [0, 32], sizes = [2, 32], strides = [1, 1]} : vector<2x128xf32> to vector<2x32xf32>
    %412 = vector.extract_strided_slice %409 {offsets = [0, 64], sizes = [2, 32], strides = [1, 1]} : vector<2x128xf32> to vector<2x32xf32>
    %cst_85 = arith.constant 2.000000e+00 : f32
    %413 = vector.broadcast %cst_85 : f32 to vector<2x32xf32>
    %414 = arith.mulf %413, %412 : vector<2x32xf32>
    %cst_86 = arith.constant 1.000000e+00 : f32
    %415 = vector.broadcast %cst_86 : f32 to vector<2x32xf32>
    %416 = arith.subf %414, %415 : vector<2x32xf32>
    %417 = vector.extract_strided_slice %409 {offsets = [0, 96], sizes = [2, 32], strides = [1, 1]} : vector<2x128xf32> to vector<2x32xf32>
    %418 = arith.mulf %411, %371 : vector<2x32xf32>
    %419 = arith.mulf %410, %416 : vector<2x32xf32>
    %420 = arith.addf %418, %419 : vector<2x32xf32>
    %421 = math.tanh %420 : vector<2x32xf32>
    %422 = arith.mulf %417, %421 : vector<2x32xf32>
    %423 = vector.extract_strided_slice %0 {offsets = [14, 0], sizes = [2, 1], strides = [1, 1]} : vector<16x4xf32> to vector<2x1xf32>
    %424 = vector.shape_cast %423 : vector<2x1xf32> to vector<2x1xf32>
    %425 = vector.broadcast %424 : vector<2x1xf32> to vector<2x128xf32>
    %426 = vector.broadcast %21 : vector<1x128xf32> to vector<2x128xf32>
    %427 = arith.mulf %425, %426 : vector<2x128xf32>
    %428 = arith.truncf %397 : vector<2x32xf32> to vector<2x32xbf16>
    %cst_87 = arith.constant dense<0.000000e+00> : vector<2x128xf32>
    %429 = tpu.matmul %428, %8, %cst_87 {dimension_numbers = #tpu.dot_dimension_numbers<[1], [0], [0], [1], [0, 0, 1, 1], [], []>} : vector<2x32xbf16>, vector<32x128xbf16>, vector<2x128xf32> -> vector<2x128xf32>
    %430 = arith.addf %427, %429 : vector<2x128xf32>
    %431 = vector.broadcast %22 : vector<1x128xf32> to vector<2x128xf32>
    %432 = arith.addf %430, %431 : vector<2x128xf32>
    %433 = arith.negf %432 : vector<2x128xf32>
    %434 = math.exp %433 : vector<2x128xf32>
    %cst_88 = arith.constant 1.000000e+00 : f32
    %435 = vector.broadcast %cst_88 : f32 to vector<2x128xf32>
    %436 = arith.addf %435, %434 : vector<2x128xf32>
    %437 = arith.divf %435, %436 : vector<2x128xf32>
    %438 = vector.extract_strided_slice %437 {offsets = [0, 0], sizes = [2, 32], strides = [1, 1]} : vector<2x128xf32> to vector<2x32xf32>
    %439 = vector.extract_strided_slice %437 {offsets = [0, 32], sizes = [2, 32], strides = [1, 1]} : vector<2x128xf32> to vector<2x32xf32>
    %440 = vector.extract_strided_slice %437 {offsets = [0, 64], sizes = [2, 32], strides = [1, 1]} : vector<2x128xf32> to vector<2x32xf32>
    %cst_89 = arith.constant 2.000000e+00 : f32
    %441 = vector.broadcast %cst_89 : f32 to vector<2x32xf32>
    %442 = arith.mulf %441, %440 : vector<2x32xf32>
    %cst_90 = arith.constant 1.000000e+00 : f32
    %443 = vector.broadcast %cst_90 : f32 to vector<2x32xf32>
    %444 = arith.subf %442, %443 : vector<2x32xf32>
    %445 = vector.extract_strided_slice %437 {offsets = [0, 96], sizes = [2, 32], strides = [1, 1]} : vector<2x128xf32> to vector<2x32xf32>
    %446 = arith.mulf %439, %395 : vector<2x32xf32>
    %447 = arith.mulf %438, %444 : vector<2x32xf32>
    %448 = arith.addf %446, %447 : vector<2x32xf32>
    %449 = math.tanh %448 : vector<2x32xf32>
    %450 = arith.mulf %445, %449 : vector<2x32xf32>
    %451 = arith.truncf %450 : vector<2x32xf32> to vector<2x32xbf16>
    %cst_91 = arith.constant dense<0.000000e+00> : vector<2x128xf32>
    %452 = tpu.matmul %451, %17, %cst_91 {dimension_numbers = #tpu.dot_dimension_numbers<[1], [0], [0], [1], [0, 0, 1, 1], [], []>} : vector<2x32xbf16>, vector<32x128xbf16>, vector<2x128xf32> -> vector<2x128xf32>
    %453 = arith.truncf %422 : vector<2x32xf32> to vector<2x32xbf16>
    %cst_92 = arith.constant dense<0.000000e+00> : vector<2x128xf32>
    %454 = tpu.matmul %453, %10, %cst_92 {dimension_numbers = #tpu.dot_dimension_numbers<[1], [0], [0], [1], [0, 0, 1, 1], [], []>} : vector<2x32xbf16>, vector<32x128xbf16>, vector<2x128xf32> -> vector<2x128xf32>
    %455 = arith.addf %452, %454 : vector<2x128xf32>
    %456 = vector.broadcast %23 : vector<1x128xf32> to vector<2x128xf32>
    %457 = arith.addf %455, %456 : vector<2x128xf32>
    %458 = arith.negf %457 : vector<2x128xf32>
    %459 = math.exp %458 : vector<2x128xf32>
    %cst_93 = arith.constant 1.000000e+00 : f32
    %460 = vector.broadcast %cst_93 : f32 to vector<2x128xf32>
    %461 = arith.addf %460, %459 : vector<2x128xf32>
    %462 = arith.divf %460, %461 : vector<2x128xf32>
    %463 = vector.extract_strided_slice %462 {offsets = [0, 0], sizes = [2, 32], strides = [1, 1]} : vector<2x128xf32> to vector<2x32xf32>
    %464 = vector.extract_strided_slice %462 {offsets = [0, 32], sizes = [2, 32], strides = [1, 1]} : vector<2x128xf32> to vector<2x32xf32>
    %465 = vector.extract_strided_slice %462 {offsets = [0, 64], sizes = [2, 32], strides = [1, 1]} : vector<2x128xf32> to vector<2x32xf32>
    %cst_94 = arith.constant 2.000000e+00 : f32
    %466 = vector.broadcast %cst_94 : f32 to vector<2x32xf32>
    %467 = arith.mulf %466, %465 : vector<2x32xf32>
    %cst_95 = arith.constant 1.000000e+00 : f32
    %468 = vector.broadcast %cst_95 : f32 to vector<2x32xf32>
    %469 = arith.subf %467, %468 : vector<2x32xf32>
    %470 = vector.extract_strided_slice %462 {offsets = [0, 96], sizes = [2, 32], strides = [1, 1]} : vector<2x128xf32> to vector<2x32xf32>
    %471 = arith.mulf %464, %420 : vector<2x32xf32>
    %472 = arith.mulf %463, %469 : vector<2x32xf32>
    %473 = arith.addf %471, %472 : vector<2x32xf32>
    %474 = math.tanh %473 : vector<2x32xf32>
    %475 = arith.mulf %470, %474 : vector<2x32xf32>
    %476 = arith.truncf %475 : vector<2x32xf32> to vector<2x32xbf16>
    %cst_96 = arith.constant dense<0.000000e+00> : vector<2x128xf32>
    %477 = tpu.matmul %476, %12, %cst_96 {dimension_numbers = #tpu.dot_dimension_numbers<[1], [0], [0], [1], [0, 0, 1, 1], [], []>} : vector<2x32xbf16>, vector<32x128xbf16>, vector<2x128xf32> -> vector<2x128xf32>
    %478 = vector.broadcast %24 : vector<1x128xf32> to vector<2x128xf32>
    %479 = arith.addf %477, %478 : vector<2x128xf32>
    %480 = arith.negf %479 : vector<2x128xf32>
    %481 = math.exp %480 : vector<2x128xf32>
    %cst_97 = arith.constant 1.000000e+00 : f32
    %482 = vector.broadcast %cst_97 : f32 to vector<2x128xf32>
    %483 = arith.addf %482, %481 : vector<2x128xf32>
    %484 = arith.divf %482, %483 : vector<2x128xf32>
    %485 = vector.extract_strided_slice %484 {offsets = [0, 0], sizes = [2, 1], strides = [1, 1]} : vector<2x128xf32> to vector<2x1xf32>
    %486 = vector.broadcast %21 : vector<1x128xf32> to vector<2x128xf32>
    %487 = arith.mulf %484, %486 : vector<2x128xf32>
    %488 = arith.truncf %450 : vector<2x32xf32> to vector<2x32xbf16>
    %cst_98 = arith.constant dense<0.000000e+00> : vector<2x128xf32>
    %489 = tpu.matmul %488, %8, %cst_98 {dimension_numbers = #tpu.dot_dimension_numbers<[1], [0], [0], [1], [0, 0, 1, 1], [], []>} : vector<2x32xbf16>, vector<32x128xbf16>, vector<2x128xf32> -> vector<2x128xf32>
    %490 = arith.addf %487, %489 : vector<2x128xf32>
    %491 = vector.broadcast %22 : vector<1x128xf32> to vector<2x128xf32>
    %492 = arith.addf %490, %491 : vector<2x128xf32>
    %493 = arith.negf %492 : vector<2x128xf32>
    %494 = math.exp %493 : vector<2x128xf32>
    %cst_99 = arith.constant 1.000000e+00 : f32
    %495 = vector.broadcast %cst_99 : f32 to vector<2x128xf32>
    %496 = arith.addf %495, %494 : vector<2x128xf32>
    %497 = arith.divf %495, %496 : vector<2x128xf32>
    %498 = vector.extract_strided_slice %497 {offsets = [0, 0], sizes = [2, 32], strides = [1, 1]} : vector<2x128xf32> to vector<2x32xf32>
    %499 = vector.extract_strided_slice %497 {offsets = [0, 32], sizes = [2, 32], strides = [1, 1]} : vector<2x128xf32> to vector<2x32xf32>
    %500 = vector.extract_strided_slice %497 {offsets = [0, 64], sizes = [2, 32], strides = [1, 1]} : vector<2x128xf32> to vector<2x32xf32>
    %cst_100 = arith.constant 2.000000e+00 : f32
    %501 = vector.broadcast %cst_100 : f32 to vector<2x32xf32>
    %502 = arith.mulf %501, %500 : vector<2x32xf32>
    %cst_101 = arith.constant 1.000000e+00 : f32
    %503 = vector.broadcast %cst_101 : f32 to vector<2x32xf32>
    %504 = arith.subf %502, %503 : vector<2x32xf32>
    %505 = vector.extract_strided_slice %497 {offsets = [0, 96], sizes = [2, 32], strides = [1, 1]} : vector<2x128xf32> to vector<2x32xf32>
    %506 = arith.mulf %499, %448 : vector<2x32xf32>
    %507 = arith.mulf %498, %504 : vector<2x32xf32>
    %508 = arith.addf %506, %507 : vector<2x32xf32>
    %509 = math.tanh %508 : vector<2x32xf32>
    %510 = arith.mulf %505, %509 : vector<2x32xf32>
    %511 = arith.truncf %510 : vector<2x32xf32> to vector<2x32xbf16>
    %cst_102 = arith.constant dense<0.000000e+00> : vector<2x128xf32>
    %512 = tpu.matmul %511, %17, %cst_102 {dimension_numbers = #tpu.dot_dimension_numbers<[1], [0], [0], [1], [0, 0, 1, 1], [], []>} : vector<2x32xbf16>, vector<32x128xbf16>, vector<2x128xf32> -> vector<2x128xf32>
    %513 = arith.truncf %475 : vector<2x32xf32> to vector<2x32xbf16>
    %cst_103 = arith.constant dense<0.000000e+00> : vector<2x128xf32>
    %514 = tpu.matmul %513, %10, %cst_103 {dimension_numbers = #tpu.dot_dimension_numbers<[1], [0], [0], [1], [0, 0, 1, 1], [], []>} : vector<2x32xbf16>, vector<32x128xbf16>, vector<2x128xf32> -> vector<2x128xf32>
    %515 = arith.addf %512, %514 : vector<2x128xf32>
    %516 = vector.broadcast %23 : vector<1x128xf32> to vector<2x128xf32>
    %517 = arith.addf %515, %516 : vector<2x128xf32>
    %518 = arith.negf %517 : vector<2x128xf32>
    %519 = math.exp %518 : vector<2x128xf32>
    %cst_104 = arith.constant 1.000000e+00 : f32
    %520 = vector.broadcast %cst_104 : f32 to vector<2x128xf32>
    %521 = arith.addf %520, %519 : vector<2x128xf32>
    %522 = arith.divf %520, %521 : vector<2x128xf32>
    %523 = vector.extract_strided_slice %522 {offsets = [0, 0], sizes = [2, 32], strides = [1, 1]} : vector<2x128xf32> to vector<2x32xf32>
    %524 = vector.extract_strided_slice %522 {offsets = [0, 32], sizes = [2, 32], strides = [1, 1]} : vector<2x128xf32> to vector<2x32xf32>
    %525 = vector.extract_strided_slice %522 {offsets = [0, 64], sizes = [2, 32], strides = [1, 1]} : vector<2x128xf32> to vector<2x32xf32>
    %cst_105 = arith.constant 2.000000e+00 : f32
    %526 = vector.broadcast %cst_105 : f32 to vector<2x32xf32>
    %527 = arith.mulf %526, %525 : vector<2x32xf32>
    %cst_106 = arith.constant 1.000000e+00 : f32
    %528 = vector.broadcast %cst_106 : f32 to vector<2x32xf32>
    %529 = arith.subf %527, %528 : vector<2x32xf32>
    %530 = vector.extract_strided_slice %522 {offsets = [0, 96], sizes = [2, 32], strides = [1, 1]} : vector<2x128xf32> to vector<2x32xf32>
    %531 = arith.mulf %524, %473 : vector<2x32xf32>
    %532 = arith.mulf %523, %529 : vector<2x32xf32>
    %533 = arith.addf %531, %532 : vector<2x32xf32>
    %534 = math.tanh %533 : vector<2x32xf32>
    %535 = arith.mulf %530, %534 : vector<2x32xf32>
    %536 = arith.truncf %535 : vector<2x32xf32> to vector<2x32xbf16>
    %cst_107 = arith.constant dense<0.000000e+00> : vector<2x128xf32>
    %537 = tpu.matmul %536, %12, %cst_107 {dimension_numbers = #tpu.dot_dimension_numbers<[1], [0], [0], [1], [0, 0, 1, 1], [], []>} : vector<2x32xbf16>, vector<32x128xbf16>, vector<2x128xf32> -> vector<2x128xf32>
    %538 = vector.broadcast %24 : vector<1x128xf32> to vector<2x128xf32>
    %539 = arith.addf %537, %538 : vector<2x128xf32>
    %540 = arith.negf %539 : vector<2x128xf32>
    %541 = math.exp %540 : vector<2x128xf32>
    %cst_108 = arith.constant 1.000000e+00 : f32
    %542 = vector.broadcast %cst_108 : f32 to vector<2x128xf32>
    %543 = arith.addf %542, %541 : vector<2x128xf32>
    %544 = arith.divf %542, %543 : vector<2x128xf32>
    %545 = vector.extract_strided_slice %544 {offsets = [0, 0], sizes = [2, 1], strides = [1, 1]} : vector<2x128xf32> to vector<2x1xf32>
    %546 = vector.broadcast %21 : vector<1x128xf32> to vector<2x128xf32>
    %547 = arith.mulf %544, %546 : vector<2x128xf32>
    %548 = arith.truncf %510 : vector<2x32xf32> to vector<2x32xbf16>
    %cst_109 = arith.constant dense<0.000000e+00> : vector<2x128xf32>
    %549 = tpu.matmul %548, %8, %cst_109 {dimension_numbers = #tpu.dot_dimension_numbers<[1], [0], [0], [1], [0, 0, 1, 1], [], []>} : vector<2x32xbf16>, vector<32x128xbf16>, vector<2x128xf32> -> vector<2x128xf32>
    %550 = arith.addf %547, %549 : vector<2x128xf32>
    %551 = vector.broadcast %22 : vector<1x128xf32> to vector<2x128xf32>
    %552 = arith.addf %550, %551 : vector<2x128xf32>
    %553 = arith.negf %552 : vector<2x128xf32>
    %554 = math.exp %553 : vector<2x128xf32>
    %cst_110 = arith.constant 1.000000e+00 : f32
    %555 = vector.broadcast %cst_110 : f32 to vector<2x128xf32>
    %556 = arith.addf %555, %554 : vector<2x128xf32>
    %557 = arith.divf %555, %556 : vector<2x128xf32>
    %558 = vector.extract_strided_slice %557 {offsets = [0, 0], sizes = [2, 32], strides = [1, 1]} : vector<2x128xf32> to vector<2x32xf32>
    %559 = vector.extract_strided_slice %557 {offsets = [0, 32], sizes = [2, 32], strides = [1, 1]} : vector<2x128xf32> to vector<2x32xf32>
    %560 = vector.extract_strided_slice %557 {offsets = [0, 64], sizes = [2, 32], strides = [1, 1]} : vector<2x128xf32> to vector<2x32xf32>
    %cst_111 = arith.constant 2.000000e+00 : f32
    %561 = vector.broadcast %cst_111 : f32 to vector<2x32xf32>
    %562 = arith.mulf %561, %560 : vector<2x32xf32>
    %cst_112 = arith.constant 1.000000e+00 : f32
    %563 = vector.broadcast %cst_112 : f32 to vector<2x32xf32>
    %564 = arith.subf %562, %563 : vector<2x32xf32>
    %565 = vector.extract_strided_slice %557 {offsets = [0, 96], sizes = [2, 32], strides = [1, 1]} : vector<2x128xf32> to vector<2x32xf32>
    %566 = arith.mulf %559, %508 : vector<2x32xf32>
    %567 = arith.mulf %558, %564 : vector<2x32xf32>
    %568 = arith.addf %566, %567 : vector<2x32xf32>
    %569 = math.tanh %568 : vector<2x32xf32>
    %570 = arith.mulf %565, %569 : vector<2x32xf32>
    %571 = arith.truncf %570 : vector<2x32xf32> to vector<2x32xbf16>
    %cst_113 = arith.constant dense<0.000000e+00> : vector<2x128xf32>
    %572 = tpu.matmul %571, %17, %cst_113 {dimension_numbers = #tpu.dot_dimension_numbers<[1], [0], [0], [1], [0, 0, 1, 1], [], []>} : vector<2x32xbf16>, vector<32x128xbf16>, vector<2x128xf32> -> vector<2x128xf32>
    %573 = arith.truncf %535 : vector<2x32xf32> to vector<2x32xbf16>
    %cst_114 = arith.constant dense<0.000000e+00> : vector<2x128xf32>
    %574 = tpu.matmul %573, %10, %cst_114 {dimension_numbers = #tpu.dot_dimension_numbers<[1], [0], [0], [1], [0, 0, 1, 1], [], []>} : vector<2x32xbf16>, vector<32x128xbf16>, vector<2x128xf32> -> vector<2x128xf32>
    %575 = arith.addf %572, %574 : vector<2x128xf32>
    %576 = vector.broadcast %23 : vector<1x128xf32> to vector<2x128xf32>
    %577 = arith.addf %575, %576 : vector<2x128xf32>
    %578 = arith.negf %577 : vector<2x128xf32>
    %579 = math.exp %578 : vector<2x128xf32>
    %cst_115 = arith.constant 1.000000e+00 : f32
    %580 = vector.broadcast %cst_115 : f32 to vector<2x128xf32>
    %581 = arith.addf %580, %579 : vector<2x128xf32>
    %582 = arith.divf %580, %581 : vector<2x128xf32>
    %583 = vector.extract_strided_slice %582 {offsets = [0, 0], sizes = [2, 32], strides = [1, 1]} : vector<2x128xf32> to vector<2x32xf32>
    %584 = vector.extract_strided_slice %582 {offsets = [0, 32], sizes = [2, 32], strides = [1, 1]} : vector<2x128xf32> to vector<2x32xf32>
    %585 = vector.extract_strided_slice %582 {offsets = [0, 64], sizes = [2, 32], strides = [1, 1]} : vector<2x128xf32> to vector<2x32xf32>
    %cst_116 = arith.constant 2.000000e+00 : f32
    %586 = vector.broadcast %cst_116 : f32 to vector<2x32xf32>
    %587 = arith.mulf %586, %585 : vector<2x32xf32>
    %cst_117 = arith.constant 1.000000e+00 : f32
    %588 = vector.broadcast %cst_117 : f32 to vector<2x32xf32>
    %589 = arith.subf %587, %588 : vector<2x32xf32>
    %590 = vector.extract_strided_slice %582 {offsets = [0, 96], sizes = [2, 32], strides = [1, 1]} : vector<2x128xf32> to vector<2x32xf32>
    %591 = arith.mulf %584, %533 : vector<2x32xf32>
    %592 = arith.mulf %583, %589 : vector<2x32xf32>
    %593 = arith.addf %591, %592 : vector<2x32xf32>
    %594 = math.tanh %593 : vector<2x32xf32>
    %595 = arith.mulf %590, %594 : vector<2x32xf32>
    %596 = arith.truncf %595 : vector<2x32xf32> to vector<2x32xbf16>
    %cst_118 = arith.constant dense<0.000000e+00> : vector<2x128xf32>
    %597 = tpu.matmul %596, %12, %cst_118 {dimension_numbers = #tpu.dot_dimension_numbers<[1], [0], [0], [1], [0, 0, 1, 1], [], []>} : vector<2x32xbf16>, vector<32x128xbf16>, vector<2x128xf32> -> vector<2x128xf32>
    %598 = vector.broadcast %24 : vector<1x128xf32> to vector<2x128xf32>
    %599 = arith.addf %597, %598 : vector<2x128xf32>
    %600 = arith.negf %599 : vector<2x128xf32>
    %601 = math.exp %600 : vector<2x128xf32>
    %cst_119 = arith.constant 1.000000e+00 : f32
    %602 = vector.broadcast %cst_119 : f32 to vector<2x128xf32>
    %603 = arith.addf %602, %601 : vector<2x128xf32>
    %604 = arith.divf %602, %603 : vector<2x128xf32>
    %605 = vector.extract_strided_slice %604 {offsets = [0, 0], sizes = [2, 1], strides = [1, 1]} : vector<2x128xf32> to vector<2x1xf32>
    %606 = vector.broadcast %21 : vector<1x128xf32> to vector<2x128xf32>
    %607 = arith.mulf %604, %606 : vector<2x128xf32>
    %608 = arith.truncf %570 : vector<2x32xf32> to vector<2x32xbf16>
    %cst_120 = arith.constant dense<0.000000e+00> : vector<2x128xf32>
    %609 = tpu.matmul %608, %8, %cst_120 {dimension_numbers = #tpu.dot_dimension_numbers<[1], [0], [0], [1], [0, 0, 1, 1], [], []>} : vector<2x32xbf16>, vector<32x128xbf16>, vector<2x128xf32> -> vector<2x128xf32>
    %610 = arith.addf %607, %609 : vector<2x128xf32>
    %611 = vector.broadcast %22 : vector<1x128xf32> to vector<2x128xf32>
    %612 = arith.addf %610, %611 : vector<2x128xf32>
    %613 = arith.negf %612 : vector<2x128xf32>
    %614 = math.exp %613 : vector<2x128xf32>
    %cst_121 = arith.constant 1.000000e+00 : f32
    %615 = vector.broadcast %cst_121 : f32 to vector<2x128xf32>
    %616 = arith.addf %615, %614 : vector<2x128xf32>
    %617 = arith.divf %615, %616 : vector<2x128xf32>
    %618 = vector.extract_strided_slice %617 {offsets = [0, 0], sizes = [2, 32], strides = [1, 1]} : vector<2x128xf32> to vector<2x32xf32>
    %619 = vector.extract_strided_slice %617 {offsets = [0, 32], sizes = [2, 32], strides = [1, 1]} : vector<2x128xf32> to vector<2x32xf32>
    %620 = vector.extract_strided_slice %617 {offsets = [0, 64], sizes = [2, 32], strides = [1, 1]} : vector<2x128xf32> to vector<2x32xf32>
    %cst_122 = arith.constant 2.000000e+00 : f32
    %621 = vector.broadcast %cst_122 : f32 to vector<2x32xf32>
    %622 = arith.mulf %621, %620 : vector<2x32xf32>
    %cst_123 = arith.constant 1.000000e+00 : f32
    %623 = vector.broadcast %cst_123 : f32 to vector<2x32xf32>
    %624 = arith.subf %622, %623 : vector<2x32xf32>
    %625 = vector.extract_strided_slice %617 {offsets = [0, 96], sizes = [2, 32], strides = [1, 1]} : vector<2x128xf32> to vector<2x32xf32>
    %626 = arith.mulf %619, %568 : vector<2x32xf32>
    %627 = arith.mulf %618, %624 : vector<2x32xf32>
    %628 = arith.addf %626, %627 : vector<2x32xf32>
    %629 = math.tanh %628 : vector<2x32xf32>
    %630 = arith.mulf %625, %629 : vector<2x32xf32>
    %631 = arith.truncf %630 : vector<2x32xf32> to vector<2x32xbf16>
    %cst_124 = arith.constant dense<0.000000e+00> : vector<2x128xf32>
    %632 = tpu.matmul %631, %17, %cst_124 {dimension_numbers = #tpu.dot_dimension_numbers<[1], [0], [0], [1], [0, 0, 1, 1], [], []>} : vector<2x32xbf16>, vector<32x128xbf16>, vector<2x128xf32> -> vector<2x128xf32>
    %633 = arith.truncf %595 : vector<2x32xf32> to vector<2x32xbf16>
    %cst_125 = arith.constant dense<0.000000e+00> : vector<2x128xf32>
    %634 = tpu.matmul %633, %10, %cst_125 {dimension_numbers = #tpu.dot_dimension_numbers<[1], [0], [0], [1], [0, 0, 1, 1], [], []>} : vector<2x32xbf16>, vector<32x128xbf16>, vector<2x128xf32> -> vector<2x128xf32>
    %635 = arith.addf %632, %634 : vector<2x128xf32>
    %636 = vector.broadcast %23 : vector<1x128xf32> to vector<2x128xf32>
    %637 = arith.addf %635, %636 : vector<2x128xf32>
    %638 = arith.negf %637 : vector<2x128xf32>
    %639 = math.exp %638 : vector<2x128xf32>
    %cst_126 = arith.constant 1.000000e+00 : f32
    %640 = vector.broadcast %cst_126 : f32 to vector<2x128xf32>
    %641 = arith.addf %640, %639 : vector<2x128xf32>
    %642 = arith.divf %640, %641 : vector<2x128xf32>
    %643 = vector.extract_strided_slice %642 {offsets = [0, 0], sizes = [2, 32], strides = [1, 1]} : vector<2x128xf32> to vector<2x32xf32>
    %644 = vector.extract_strided_slice %642 {offsets = [0, 32], sizes = [2, 32], strides = [1, 1]} : vector<2x128xf32> to vector<2x32xf32>
    %645 = vector.extract_strided_slice %642 {offsets = [0, 64], sizes = [2, 32], strides = [1, 1]} : vector<2x128xf32> to vector<2x32xf32>
    %cst_127 = arith.constant 2.000000e+00 : f32
    %646 = vector.broadcast %cst_127 : f32 to vector<2x32xf32>
    %647 = arith.mulf %646, %645 : vector<2x32xf32>
    %cst_128 = arith.constant 1.000000e+00 : f32
    %648 = vector.broadcast %cst_128 : f32 to vector<2x32xf32>
    %649 = arith.subf %647, %648 : vector<2x32xf32>
    %650 = vector.extract_strided_slice %642 {offsets = [0, 96], sizes = [2, 32], strides = [1, 1]} : vector<2x128xf32> to vector<2x32xf32>
    %651 = arith.mulf %644, %593 : vector<2x32xf32>
    %652 = arith.mulf %643, %649 : vector<2x32xf32>
    %653 = arith.addf %651, %652 : vector<2x32xf32>
    %654 = math.tanh %653 : vector<2x32xf32>
    %655 = arith.mulf %650, %654 : vector<2x32xf32>
    %656 = arith.truncf %655 : vector<2x32xf32> to vector<2x32xbf16>
    %cst_129 = arith.constant dense<0.000000e+00> : vector<2x128xf32>
    %657 = tpu.matmul %656, %12, %cst_129 {dimension_numbers = #tpu.dot_dimension_numbers<[1], [0], [0], [1], [0, 0, 1, 1], [], []>} : vector<2x32xbf16>, vector<32x128xbf16>, vector<2x128xf32> -> vector<2x128xf32>
    %658 = vector.broadcast %24 : vector<1x128xf32> to vector<2x128xf32>
    %659 = arith.addf %657, %658 : vector<2x128xf32>
    %660 = arith.negf %659 : vector<2x128xf32>
    %661 = math.exp %660 : vector<2x128xf32>
    %cst_130 = arith.constant 1.000000e+00 : f32
    %662 = vector.broadcast %cst_130 : f32 to vector<2x128xf32>
    %663 = arith.addf %662, %661 : vector<2x128xf32>
    %664 = arith.divf %662, %663 : vector<2x128xf32>
    %665 = vector.extract_strided_slice %664 {offsets = [0, 0], sizes = [2, 1], strides = [1, 1]} : vector<2x128xf32> to vector<2x1xf32>
    %666 = tpu.concatenate %485, %545, %605, %665 in 1 : vector<2x1xf32>, vector<2x1xf32>, vector<2x1xf32>, vector<2x1xf32> -> vector<2x4xf32>
    %c0_131 = arith.constant 0 : index
    %c0_132 = arith.constant 0 : index
    %667 = vector.load %arg5[%c0_131, %c0_132] : memref<2x4xf32, #tpu.memory_space<vmem>>, vector<2x4xf32>
    tpu.vector_store %arg5[%c0_131, %c0_132], %666 {strides = array<i32>} : memref<2x4xf32, #tpu.memory_space<vmem>>, vector<2x4xf32>,
    return
  }
}

</mosaic_0001>

<llo_original>
// kernel: tpu_custom_call.1
$region0: #{tpu_custom_call.1}
  #allocation0 [shape = 'u32[]', space=smem, size = 0x4, offset = 0x4, fixed_abs, tag = 'smem constant byte address 0x4 - core index']
  #allocation1 [shape = 'u32[72,128]{1,0:T(1,128)}', space=vmem, size = 0x9000, scoped, tag = 'internal scratch']
  %s0 = inlined_call_operand.vmem [shape: f32[16,4], index: 0, kind: input, shape index: {}]
  %s1 = inlined_call_operand.vmem [shape: bf16[4,128], index: 1, kind: input, shape index: {}]
  %s2 = inlined_call_operand.hbm [shape: bf16[5,32,128], index: 2, kind: input, shape index: {}]
  %s3 = inlined_call_operand.hbm [shape: bf16[2,32,128], index: 3, kind: input, shape index: {}]
  %s4 = inlined_call_operand.vmem [shape: f32[6,128], index: 4, kind: input, shape index: {}]
  %s5 = inlined_call_operand.hbm [shape: f32[2,4], index: 5, kind: output, shape index: {}]
  %s6 = sld [smem:[#allocation0]]
  $region38: #{tpu_custom_call.1} parent=0
    _
  %s8 = ssub.s32 1, %s6
  %s9 = scalar_select 0, %s8, %s6
  $region1: #{tpu_custom_call.1} parent=0
    #allocation2 [shape = 'u8[40960]{0}', space=vmem, size = 0xa000, scoped, tag = 'input window, operand 2, single buffered']
    #allocation3 [shape = 's32[1]{0}', space=sflag, size = 0x4, scoped, tag = 'scoped memory for tpu_custom_call.1']
    #allocation4 [shape = 's32[1]{0}', space=sflag, size = 0x4, scoped, tag = 'scoped memory for tpu_custom_call.1']
    #allocation5 [shape = 'u8[16384]{0}', space=vmem, size = 0x4000, scoped, tag = 'input window, operand 3, single buffered']
    #allocation6 [shape = 's32[1]{0}', space=sflag, size = 0x4, scoped, tag = 'scoped memory for tpu_custom_call.1']
    #allocation7 [shape = 'u8[1024]{0}', space=vmem, size = 0x400, scoped, tag = 'output window, operand 0, single buffered']
    %10 = vsyncpa [#allocation3], 0
    %11 = vsyncpa [#allocation6], 0
    %12 = vsyncpa [#allocation4], 0
    // Predicated region
    $region2: #{tpu_custom_call.1} parent=1 // pred_check
      _
    $region3: #{tpu_custom_call.1} parent=1 // pred_check_branch
      %14 = sbr.rel (0) target = $region5
    $region4: #{tpu_custom_call.1} parent=1 // pred_region
      _
    $region5: #{tpu_custom_call.1} parent=1 // pred_fallthru
      _
    // Predicated region
    $region6: #{tpu_custom_call.1} parent=1 // pred_check
      _
    $region7: #{tpu_custom_call.1} parent=1 // pred_check_branch
      %16 = sbr.rel (0) target = $region9
    $region8: #{tpu_custom_call.1} parent=1 // pred_region
      _
    $region9: #{tpu_custom_call.1} parent=1 // pred_fallthru
      _
    // Predicated region
    $region10: #{tpu_custom_call.1} parent=1 // pred_check
      _
    $region11: #{tpu_custom_call.1} parent=1 // pred_check_branch
      %18 = sbr.rel (0) target = $region13
    $region12: #{tpu_custom_call.1} parent=1 // pred_region
      %20 = vsyncadd [#allocation3], 0
      %s21 = sshll.u32 %s2, 4
      %s22 = int_to_ptr.hbm [resolvable:$true] %s21
      %s23 = sshll.u32 [#allocation2], 4
      %s24 = int_to_ptr.vmem [resolvable:$true] %s23
      %29 = dma.hbm_to_vmem [thread:$0]  %s22, 1280, %s24, [#allocation3], 64, 64, 4
    $region13: #{tpu_custom_call.1} parent=1 // pred_fallthru
      _
    // Predicated region
    $region14: #{tpu_custom_call.1} parent=1 // pred_check
      _
    $region15: #{tpu_custom_call.1} parent=1 // pred_check_branch
      %31 = sbr.rel (0) target = $region17
    $region16: #{tpu_custom_call.1} parent=1 // pred_region
      %33 = vsyncadd [#allocation6], 0
      %s34 = sshll.u32 %s3, 4
      %s35 = int_to_ptr.hbm [resolvable:$true] %s34
      %s36 = sshll.u32 [#allocation5], 4
      %s37 = int_to_ptr.vmem [resolvable:$true] %s36
      %42 = dma.hbm_to_vmem [thread:$0]  %s35, 512, %s37, [#allocation6], 64, 64, 4
    $region17: #{tpu_custom_call.1} parent=1 // pred_fallthru
      _
    // Predicated region
    $region18: #{tpu_custom_call.1} parent=1 // pred_check
      _
    $region19: #{tpu_custom_call.1} parent=1 // pred_check_branch
      %44 = sbr.rel (0) target = $region21
    $region20: #{tpu_custom_call.1} parent=1 // pred_region
      _
    $region21: #{tpu_custom_call.1} parent=1 // pred_fallthru
      _
    // Predicated region
    $region22: #{tpu_custom_call.1} parent=1 // pred_check
      _
    $region23: #{tpu_custom_call.1} parent=1 // pred_check_branch
      %46 = sbr.rel (0) target = $region25
    $region24: #{tpu_custom_call.1} parent=1 // pred_region
      %48 = dma.done [#allocation3], 1280
    $region25: #{tpu_custom_call.1} parent=1 // pred_fallthru
      _
    // Predicated region
    $region26: #{tpu_custom_call.1} parent=1 // pred_check
      _
    $region27: #{tpu_custom_call.1} parent=1 // pred_check_branch
      %50 = sbr.rel (0) target = $region29
    $region28: #{tpu_custom_call.1} parent=1 // pred_region
      %52 = dma.done [#allocation6], 512
    $region29: #{tpu_custom_call.1} parent=1 // pred_fallthru
      _
    %v54 = vld [vmem:[%s0] sm:$0xff]
    %v55 = vld [vmem:[%s0 + $0x8] sm:$0xff]
    %v56 = vld [vmem:[%s1] sm:$0x3]
    %v57 = vld [vmem:[#allocation2] sm:$0xf]
    %v58 = vld [vmem:[#allocation2 + $0x4] sm:$0xf]
    %v59 = vld [vmem:[#allocation2 + $0x8] sm:$0xf]
    %v60 = vld [vmem:[#allocation2 + $0xc] sm:$0xf]
    %v61 = vld [vmem:[#allocation2 + $0x10] sm:$0xf]
    %v62 = vld [vmem:[#allocation2 + $0x14] sm:$0xf]
    %v63 = vld [vmem:[#allocation2 + $0x18] sm:$0xf]
    %v64 = vld [vmem:[#allocation2 + $0x1c] sm:$0xf]
    %v65 = vld [vmem:[#allocation2 + $0x20] sm:$0xf]
    %v66 = vld [vmem:[#allocation2 + $0x24] sm:$0xf]
    %v67 = vld [vmem:[#allocation2 + $0x28] sm:$0xf]
    %v68 = vld [vmem:[#allocation2 + $0x2c] sm:$0xf]
    %v69 = vld [vmem:[#allocation2 + $0x30] sm:$0xf]
    %v70 = vld [vmem:[#allocation2 + $0x34] sm:$0xf]
    %v71 = vld [vmem:[#allocation2 + $0x38] sm:$0xf]
    %v72 = vld [vmem:[#allocation2 + $0x3c] sm:$0xf]
    %v73 = vld [vmem:[#allocation2 + $0x40] sm:$0xf]
    %v74 = vld [vmem:[#allocation2 + $0x44] sm:$0xf]
    %v75 = vld [vmem:[#allocation2 + $0x48] sm:$0xf]
    %v76 = vld [vmem:[#allocation2 + $0x4c] sm:$0xf]
    %v77 = vld [vmem:[#allocation5] sm:$0xf]
    %v78 = vld [vmem:[#allocation5 + $0x4] sm:$0xf]
    %v79 = vld [vmem:[#allocation5 + $0x8] sm:$0xf]
    %v80 = vld [vmem:[#allocation5 + $0xc] sm:$0xf]
    %v81 = vld [vmem:[#allocation5 + $0x10] sm:$0xf]
    %v82 = vld [vmem:[#allocation5 + $0x14] sm:$0xf]
    %v83 = vld [vmem:[#allocation5 + $0x18] sm:$0xf]
    %v84 = vld [vmem:[#allocation5 + $0x1c] sm:$0xf]
    %v85 = vld [vmem:[%s4] sm:$0x3f]
    %v86 = vpack.c.bf16 %v55, %v54
    %vm87 = vcmask 31744
    %v89 = vsel %vm87, %v86, 0
    %vm91 = vcmask 1041408
    %v93 = vsel %vm91, %v56, 0
    %95 = vmatpush.bf16.msra.mxu0 0
    %96 = vmatpush.bf16.msra.mxu0 0
    %97 = vmatpush.bf16.msra.mxu0 0
    %98 = vmatpush.bf16.msra.mxu0 0
    %99 = vmatpush.bf16.msra.mxu0 0
    %100 = vmatpush.bf16.msra.mxu0 0
    %101 = vmatpush.bf16.msra.mxu0 0
    %102 = vmatpush.bf16.msra.mxu0 %v93
    %103 = vmatmul.bf16.gmra.mxu0 %v89
    %v104 = vpop.f32.mrf.mxu0
    %v105 = vadd.f32 0.0, %v104
    %v106 = vpop.f32.mrf.mxu0
    %v107 = vadd.f32 0.0, %v106
    %108 = vdwg.mxu0
    %v113 = vunpack.c.l.b16 %v57
    %v114 = vunpack.c.l.b16 %v58
    %v115 = vunpack.c.l.b16 %v59
    %v116 = vunpack.c.l.b16 %v60
    %v117 = vpack.c.b16 %v114, %v113
    %v118 = vpack.c.b16 %v116, %v115
    %vm121 = vcmask 261120
    %v123 = vsel %vm121, 0, 0
    %125 = vmatpush.bf16.msra.mxu0 0
    %126 = vmatpush.bf16.msra.mxu0 0
    %127 = vmatpush.bf16.msra.mxu0 0
    %128 = vmatpush.bf16.msra.mxu0 0
    %129 = vmatpush.bf16.msra.mxu0 0
    %130 = vmatpush.bf16.msra.mxu0 0
    %131 = vmatpush.bf16.msra.mxu0 %v118
    %132 = vmatpush.bf16.msra.mxu0 %v117
    %133 = vmatmul.bf16.gmra.mxu0 %v123
    %v134 = vpop.f32.mrf.mxu0
    %v135 = vadd.f32 0.0, %v134
    %v136 = vpop.f32.mrf.mxu0
    %137 = vdwg.mxu0
    %v138 = vadd.f32 %v105, %v135
    %v139 = vperm.slane %v85, 0
    %v140 = vadd.f32 %v138, %v139
    %v141 = vxor.u32 %v140, 2147483648
    %v142 = vmul.f32 %v141, 1.442695
    %v143 = vpow.pop %v142
    %v144 = vadd.f32 %v143, 1.0
    %v145 = vrcp.pop %v144
    %v146 = vmul.f32 %v144, %v145
    %v147 = vsub.f32 1.0, %v146
    %v148 = vmul.f32 %v145, %v147
    %v149 = vadd.f32 %v145, %v148
    %vm150 = vweird.f32 %v144
    %vm151 = vweird.f32 %v145
    %vm152 = vmor %vm150, %vm151
    %v153 = vsel %vm152, %v145, %v149
    %v154 = vand.u32 2147483647, %v144
    %vm155 = vcmp.eq.f32.partialorder %v154, 8.507059e+37
    %v156 = vand.u32 %v144, 2147483648
    %v157 = vor.u32 1.1754944e-38, %v156
    %v158 = vsel %vm155, %v157, %v153
    %v159 = vmul.f32 1.0, %v158
    %v160 = vmul.f32 %v159, 2.0
    %v161 = vsub.f32 %v160, 1.0
    %v162 = vmul.f32 %v159, 0.0
    %164 = vrot.lane.b32.xlu0 %v161, 64
    %v165 = vpop.permute.xlu0 %164
    %v167 = vmul.f32 %v159, %v165
    %169 = vrot.lane.b32.xlu0 %v167, 32
    %v170 = vpop.permute.xlu0 %169
    %v172 = vadd.f32 %v162, %v170
    %v173 = vtanh.pop %v172
    %175 = vrot.lane.b32.xlu0 %v173, 64
    %v176 = vpop.permute.xlu0 %175
    %v178 = vmul.f32 %v159, %v176
    %v179 = vpack.c.bf16 %v178, %v178
    %v184 = vunpack.c.l.b16 %v61
    %v185 = vunpack.c.l.b16 %v62
    %v186 = vunpack.c.l.b16 %v63
    %v187 = vunpack.c.l.b16 %v64
    %v188 = vpack.c.b16 %v185, %v184
    %v189 = vpack.c.b16 %v187, %v186
    %192 = vmatpush.bf16.msra.mxu0 0
    %193 = vmatpush.bf16.msra.mxu0 0
    %194 = vmatpush.bf16.msra.mxu0 0
    %195 = vmatpush.bf16.msra.mxu0 0
    %196 = vmatpush.bf16.msra.mxu0 0
    %197 = vmatpush.bf16.msra.mxu0 0
    %198 = vmatpush.bf16.msra.mxu0 %v189
    %199 = vmatpush.bf16.msra.mxu0 %v188
    %200 = vmatmul.bf16.gmra.mxu0 %v123
    %v201 = vpop.f32.mrf.mxu0
    %v202 = vadd.f32 0.0, %v201
    %v203 = vpop.f32.mrf.mxu0
    %204 = vdwg.mxu0
    %206 = vrot.lane.b32.xlu0 %v179, 32
    %v207 = vpop.permute.xlu0 %206
    %v212 = vunpack.c.l.b16 %v77
    %v213 = vunpack.c.l.b16 %v78
    %v214 = vunpack.c.l.b16 %v79
    %v215 = vunpack.c.l.b16 %v80
    %v216 = vpack.c.b16 %v213, %v212
    %v217 = vpack.c.b16 %v215, %v214
    %v221 = vsel %vm121, %v207, 0
    %223 = vmatpush.bf16.msra.mxu0 0
    %224 = vmatpush.bf16.msra.mxu0 0
    %225 = vmatpush.bf16.msra.mxu0 0
    %226 = vmatpush.bf16.msra.mxu0 0
    %227 = vmatpush.bf16.msra.mxu0 0
    %228 = vmatpush.bf16.msra.mxu0 0
    %229 = vmatpush.bf16.msra.mxu0 %v217
    %230 = vmatpush.bf16.msra.mxu0 %v216
    %231 = vmatmul.bf16.gmra.mxu0 %v221
    %v232 = vpop.f32.mrf.mxu0
    %v233 = vadd.f32 %v202, %v232
    %v234 = vpop.f32.mrf.mxu0
    %235 = vdwg.mxu0
    %v236 = vperm.slane %v85, 1
    %v237 = vadd.f32 %v233, %v236
    %v238 = vxor.u32 %v237, 2147483648
    %v239 = vmul.f32 %v238, 1.442695
    %v240 = vpow.pop %v239
    %v241 = vadd.f32 %v240, 1.0
    %v242 = vrcp.pop %v241
    %v243 = vmul.f32 %v241, %v242
    %v244 = vsub.f32 1.0, %v243
    %v245 = vmul.f32 %v242, %v244
    %v246 = vadd.f32 %v242, %v245
    %vm247 = vweird.f32 %v241
    %vm248 = vweird.f32 %v242
    %vm249 = vmor %vm247, %vm248
    %v250 = vsel %vm249, %v242, %v246
    %v251 = vand.u32 2147483647, %v241
    %vm252 = vcmp.eq.f32.partialorder %v251, 8.507059e+37
    %v253 = vand.u32 %v241, 2147483648
    %v254 = vor.u32 1.1754944e-38, %v253
    %v255 = vsel %vm252, %v254, %v250
    %v256 = vmul.f32 1.0, %v255
    %v257 = vmul.f32 %v256, 2.0
    %v258 = vsub.f32 %v257, 1.0
    %v259 = vmul.f32 %v256, 0.0
    %261 = vrot.lane.b32.xlu0 %v258, 64
    %v262 = vpop.permute.xlu0 %261
    %v264 = vmul.f32 %v256, %v262
    %266 = vrot.lane.b32.xlu0 %v264, 32
    %v267 = vpop.permute.xlu0 %266
    %v269 = vadd.f32 %v259, %v267
    %v270 = vtanh.pop %v269
    %272 = vrot.lane.b32.xlu0 %v270, 64
    %v273 = vpop.permute.xlu0 %272
    %v275 = vmul.f32 %v256, %v273
    %276 = vmatpush.bf16.msra.mxu0 0
    %277 = vmatpush.bf16.msra.mxu0 0
    %278 = vmatpush.bf16.msra.mxu0 0
    %279 = vmatpush.bf16.msra.mxu0 0
    %280 = vmatpush.bf16.msra.mxu0 0
    %281 = vmatpush.bf16.msra.mxu0 0
    %282 = vmatpush.bf16.msra.mxu0 %v118
    %283 = vmatpush.bf16.msra.mxu0 %v117
    %284 = vmatmul.bf16.gmra.mxu0 %v221
    %v285 = vpop.f32.mrf.mxu0
    %v286 = vadd.f32 0.0, %v285
    %v287 = vpop.f32.mrf.mxu0
    %288 = vdwg.mxu0
    %v290 = vrot.slane %v286, 6
    %v292 = vadd.f32 %v105, %v290
    %v293 = vadd.f32 %v292, %v139
    %v294 = vxor.u32 %v293, 2147483648
    %v295 = vmul.f32 %v294, 1.442695
    %v296 = vpow.pop %v295
    %v297 = vadd.f32 %v296, 1.0
    %v298 = vrcp.pop %v297
    %v299 = vmul.f32 %v297, %v298
    %v300 = vsub.f32 1.0, %v299
    %v301 = vmul.f32 %v298, %v300
    %v302 = vadd.f32 %v298, %v301
    %vm303 = vweird.f32 %v297
    %vm304 = vweird.f32 %v298
    %vm305 = vmor %vm303, %vm304
    %v306 = vsel %vm305, %v298, %v302
    %v307 = vand.u32 2147483647, %v297
    %vm308 = vcmp.eq.f32.partialorder %v307, 8.507059e+37
    %v309 = vand.u32 %v297, 2147483648
    %v310 = vor.u32 1.1754944e-38, %v309
    %v311 = vsel %vm308, %v310, %v306
    %v312 = vmul.f32 1.0, %v311
    %v313 = vmul.f32 %v312, 2.0
    %v314 = vsub.f32 %v313, 1.0
    %v316 = vrot.slane %v172, 6
    %v318 = vmul.f32 %v312, %v316
    %320 = vrot.lane.b32.xlu0 %v314, 64
    %v321 = vpop.permute.xlu0 %320
    %v323 = vmul.f32 %v312, %v321
    %325 = vrot.lane.b32.xlu0 %v323, 32
    %v326 = vpop.permute.xlu0 %325
    %v328 = vadd.f32 %v318, %v326
    %v329 = vtanh.pop %v328
    %331 = vrot.lane.b32.xlu0 %v329, 64
    %v332 = vpop.permute.xlu0 %331
    %v334 = vmul.f32 %v312, %v332
    %v335 = vpack.c.bf16 %v334, %v334
    %v336 = vpack.c.bf16 %v275, %v275
    %338 = vrot.lane.b32.xlu0 %v336, 32
    %v339 = vpop.permute.xlu0 %338
    %v341 = vsel %vm121, %v339, 0
    %343 = vmatpush.bf16.msra.mxu0 0
    %344 = vmatpush.bf16.msra.mxu0 0
    %345 = vmatpush.bf16.msra.mxu0 0
    %346 = vmatpush.bf16.msra.mxu0 0
    %347 = vmatpush.bf16.msra.mxu0 0
    %348 = vmatpush.bf16.msra.mxu0 0
    %349 = vmatpush.bf16.msra.mxu0 %v189
    %350 = vmatpush.bf16.msra.mxu0 %v188
    %351 = vmatmul.bf16.gmra.mxu0 %v341
    %v352 = vpop.f32.mrf.mxu0
    %v353 = vadd.f32 0.0, %v352
    %v354 = vpop.f32.mrf.mxu0
    %355 = vdwg.mxu0
    %v357 = vrot.slane %v335, 1
    %358 = vrot.lane.b32.xlu0 %v357, 32
    %v359 = vpop.permute.xlu0 %358
    %v361 = vsel %vm121, %v359, 0
    %363 = vmatpush.bf16.msra.mxu0 0
    %364 = vmatpush.bf16.msra.mxu0 0
    %365 = vmatpush.bf16.msra.mxu0 0
    %366 = vmatpush.bf16.msra.mxu0 0
    %367 = vmatpush.bf16.msra.mxu0 0
    %368 = vmatpush.bf16.msra.mxu0 0
    %369 = vmatpush.bf16.msra.mxu0 %v217
    %370 = vmatpush.bf16.msra.mxu0 %v216
    %371 = vmatmul.bf16.gmra.mxu0 %v361
    %v372 = vpop.f32.mrf.mxu0
    %v373 = vadd.f32 %v353, %v372
    %v374 = vpop.f32.mrf.mxu0
    %375 = vdwg.mxu0
    %v376 = vadd.f32 %v373, %v236
    %v377 = vxor.u32 %v376, 2147483648
    %v378 = vmul.f32 %v377, 1.442695
    %v379 = vpow.pop %v378
    %v380 = vadd.f32 %v379, 1.0
    %v381 = vrcp.pop %v380
    %v382 = vmul.f32 %v380, %v381
    %v383 = vsub.f32 1.0, %v382
    %v384 = vmul.f32 %v381, %v383
    %v385 = vadd.f32 %v381, %v384
    %vm386 = vweird.f32 %v380
    %vm387 = vweird.f32 %v381
    %vm388 = vmor %vm386, %vm387
    %v389 = vsel %vm388, %v381, %v385
    %v390 = vand.u32 2147483647, %v380
    %vm391 = vcmp.eq.f32.partialorder %v390, 8.507059e+37
    %v392 = vand.u32 %v380, 2147483648
    %v393 = vor.u32 1.1754944e-38, %v392
    %v394 = vsel %vm391, %v393, %v389
    %v395 = vmul.f32 1.0, %v394
    %v396 = vmul.f32 %v395, 2.0
    %v397 = vsub.f32 %v396, 1.0
    %v398 = vmul.f32 %v395, %v269
    %400 = vrot.lane.b32.xlu0 %v397, 64
    %v401 = vpop.permute.xlu0 %400
    %v403 = vmul.f32 %v395, %v401
    %405 = vrot.lane.b32.xlu0 %v403, 32
    %v406 = vpop.permute.xlu0 %405
    %v408 = vadd.f32 %v398, %v406
    %v409 = vtanh.pop %v408
    %411 = vrot.lane.b32.xlu0 %v409, 64
    %v412 = vpop.permute.xlu0 %411
    %v414 = vmul.f32 %v395, %v412
    %415 = vmatpush.bf16.msra.mxu0 0
    %416 = vmatpush.bf16.msra.mxu0 0
    %417 = vmatpush.bf16.msra.mxu0 0
    %418 = vmatpush.bf16.msra.mxu0 0
    %419 = vmatpush.bf16.msra.mxu0 0
    %420 = vmatpush.bf16.msra.mxu0 0
    %421 = vmatpush.bf16.msra.mxu0 %v118
    %422 = vmatpush.bf16.msra.mxu0 %v117
    %423 = vmatmul.bf16.gmra.mxu0 %v361
    %v424 = vpop.f32.mrf.mxu0
    %v425 = vadd.f32 0.0, %v424
    %v426 = vpop.f32.mrf.mxu0
    %427 = vdwg.mxu0
    %v429 = vrot.slane %v425, 4
    %v431 = vadd.f32 %v105, %v429
    %v432 = vadd.f32 %v431, %v139
    %v433 = vxor.u32 %v432, 2147483648
    %v434 = vmul.f32 %v433, 1.442695
    %v435 = vpow.pop %v434
    %v436 = vadd.f32 %v435, 1.0
    %v437 = vrcp.pop %v436
    %v438 = vmul.f32 %v436, %v437
    %v439 = vsub.f32 1.0, %v438
    %v440 = vmul.f32 %v437, %v439
    %v441 = vadd.f32 %v437, %v440
    %vm442 = vweird.f32 %v436
    %vm443 = vweird.f32 %v437
    %vm444 = vmor %vm442, %vm443
    %v445 = vsel %vm444, %v437, %v441
    %v446 = vand.u32 2147483647, %v436
    %vm447 = vcmp.eq.f32.partialorder %v446, 8.507059e+37
    %v448 = vand.u32 %v436, 2147483648
    %v449 = vor.u32 1.1754944e-38, %v448
    %v450 = vsel %vm447, %v449, %v445
    %v451 = vmul.f32 1.0, %v450
    %v452 = vmul.f32 %v451, 2.0
    %v453 = vsub.f32 %v452, 1.0
    %v455 = vrot.slane %v328, 6
    %v457 = vmul.f32 %v451, %v455
    %459 = vrot.lane.b32.xlu0 %v453, 64
    %v460 = vpop.permute.xlu0 %459
    %v462 = vmul.f32 %v451, %v460
    %464 = vrot.lane.b32.xlu0 %v462, 32
    %v465 = vpop.permute.xlu0 %464
    %v467 = vadd.f32 %v457, %v465
    %v468 = vtanh.pop %v467
    %470 = vrot.lane.b32.xlu0 %v468, 64
    %v471 = vpop.permute.xlu0 %470
    %v473 = vmul.f32 %v451, %v471
    %v474 = vpack.c.bf16 %v473, %v473
    %v475 = vpack.c.bf16 %v414, %v414
    %477 = vrot.lane.b32.xlu0 %v475, 32
    %v478 = vpop.permute.xlu0 %477
    %v480 = vsel %vm121, %v478, 0
    %482 = vmatpush.bf16.msra.mxu0 0
    %483 = vmatpush.bf16.msra.mxu0 0
    %484 = vmatpush.bf16.msra.mxu0 0
    %485 = vmatpush.bf16.msra.mxu0 0
    %486 = vmatpush.bf16.msra.mxu0 0
    %487 = vmatpush.bf16.msra.mxu0 0
    %488 = vmatpush.bf16.msra.mxu0 %v189
    %489 = vmatpush.bf16.msra.mxu0 %v188
    %490 = vmatmul.bf16.gmra.mxu0 %v480
    %v491 = vpop.f32.mrf.mxu0
    %v492 = vadd.f32 0.0, %v491
    %v493 = vpop.f32.mrf.mxu0
    %494 = vdwg.mxu0
    %v496 = vrot.slane %v474, 2
    %497 = vrot.lane.b32.xlu0 %v496, 32
    %v498 = vpop.permute.xlu0 %497
    %v500 = vsel %vm121, %v498, 0
    %502 = vmatpush.bf16.msra.mxu0 0
    %503 = vmatpush.bf16.msra.mxu0 0
    %504 = vmatpush.bf16.msra.mxu0 0
    %505 = vmatpush.bf16.msra.mxu0 0
    %506 = vmatpush.bf16.msra.mxu0 0
    %507 = vmatpush.bf16.msra.mxu0 0
    %508 = vmatpush.bf16.msra.mxu0 %v217
    %509 = vmatpush.bf16.msra.mxu0 %v216
    %510 = vmatmul.bf16.gmra.mxu0 %v500
    %v511 = vpop.f32.mrf.mxu0
    %v512 = vadd.f32 %v492, %v511
    %v513 = vpop.f32.mrf.mxu0
    %514 = vdwg.mxu0
    %v515 = vadd.f32 %v512, %v236
    %v516 = vxor.u32 %v515, 2147483648
    %v517 = vmul.f32 %v516, 1.442695
    %v518 = vpow.pop %v517
    %v519 = vadd.f32 %v518, 1.0
    %v520 = vrcp.pop %v519
    %v521 = vmul.f32 %v519, %v520
    %v522 = vsub.f32 1.0, %v521
    %v523 = vmul.f32 %v520, %v522
    %v524 = vadd.f32 %v520, %v523
    %vm525 = vweird.f32 %v519
    %vm526 = vweird.f32 %v520
    %vm527 = vmor %vm525, %vm526
    %v528 = vsel %vm527, %v520, %v524
    %v529 = vand.u32 2147483647, %v519
    %vm530 = vcmp.eq.f32.partialorder %v529, 8.507059e+37
    %v531 = vand.u32 %v519, 2147483648
    %v532 = vor.u32 1.1754944e-38, %v531
    %v533 = vsel %vm530, %v532, %v528
    %v534 = vmul.f32 1.0, %v533
    %v535 = vmul.f32 %v534, 2.0
    %v536 = vsub.f32 %v535, 1.0
    %v537 = vmul.f32 %v534, %v408
    %539 = vrot.lane.b32.xlu0 %v536, 64
    %v540 = vpop.permute.xlu0 %539
    %v542 = vmul.f32 %v534, %v540
    %544 = vrot.lane.b32.xlu0 %v542, 32
    %v545 = vpop.permute.xlu0 %544
    %v547 = vadd.f32 %v537, %v545
    %v548 = vtanh.pop %v547
    %550 = vrot.lane.b32.xlu0 %v548, 64
    %v551 = vpop.permute.xlu0 %550
    %v553 = vmul.f32 %v534, %v551
    %554 = vmatpush.bf16.msra.mxu0 0
    %555 = vmatpush.bf16.msra.mxu0 0
    %556 = vmatpush.bf16.msra.mxu0 0
    %557 = vmatpush.bf16.msra.mxu0 0
    %558 = vmatpush.bf16.msra.mxu0 0
    %559 = vmatpush.bf16.msra.mxu0 0
    %560 = vmatpush.bf16.msra.mxu0 %v118
    %561 = vmatpush.bf16.msra.mxu0 %v117
    %562 = vmatmul.bf16.gmra.mxu0 %v500
    %v563 = vpop.f32.mrf.mxu0
    %v564 = vadd.f32 0.0, %v563
    %v565 = vpop.f32.mrf.mxu0
    %566 = vdwg.mxu0
    %v568 = vrot.slane %v564, 2
    %v570 = vadd.f32 %v105, %v568
    %v571 = vadd.f32 %v570, %v139
    %v572 = vxor.u32 %v571, 2147483648
    %v573 = vmul.f32 %v572, 1.442695
    %v574 = vpow.pop %v573
    %v575 = vadd.f32 %v574, 1.0
    %v576 = vrcp.pop %v575
    %v577 = vmul.f32 %v575, %v576
    %v578 = vsub.f32 1.0, %v577
    %v579 = vmul.f32 %v576, %v578
    %v580 = vadd.f32 %v576, %v579
    %vm581 = vweird.f32 %v575
    %vm582 = vweird.f32 %v576
    %vm583 = vmor %vm581, %vm582
    %v584 = vsel %vm583, %v576, %v580
    %v585 = vand.u32 2147483647, %v575
    %vm586 = vcmp.eq.f32.partialorder %v585, 8.507059e+37
    %v587 = vand.u32 %v575, 2147483648
    %v588 = vor.u32 1.1754944e-38, %v587
    %v589 = vsel %vm586, %v588, %v584
    %v590 = vmul.f32 1.0, %v589
    %v591 = vmul.f32 %v590, 2.0
    %v592 = vsub.f32 %v591, 1.0
    %v594 = vrot.slane %v467, 6
    %v596 = vmul.f32 %v590, %v594
    %598 = vrot.lane.b32.xlu0 %v592, 64
    %v599 = vpop.permute.xlu0 %598
    %v601 = vmul.f32 %v590, %v599
    %603 = vrot.lane.b32.xlu0 %v601, 32
    %v604 = vpop.permute.xlu0 %603
    %v606 = vadd.f32 %v596, %v604
    %v607 = vtanh.pop %v606
    %609 = vrot.lane.b32.xlu0 %v607, 64
    %v610 = vpop.permute.xlu0 %609
    %v612 = vmul.f32 %v590, %v610
    %v613 = vpack.c.bf16 %v612, %v612
    %v614 = vpack.c.bf16 %v553, %v553
    %616 = vrot.lane.b32.xlu0 %v614, 32
    %v617 = vpop.permute.xlu0 %616
    %v619 = vsel %vm121, %v617, 0
    %621 = vmatpush.bf16.msra.mxu0 0
    %622 = vmatpush.bf16.msra.mxu0 0
    %623 = vmatpush.bf16.msra.mxu0 0
    %624 = vmatpush.bf16.msra.mxu0 0
    %625 = vmatpush.bf16.msra.mxu0 0
    %626 = vmatpush.bf16.msra.mxu0 0
    %627 = vmatpush.bf16.msra.mxu0 %v189
    %628 = vmatpush.bf16.msra.mxu0 %v188
    %629 = vmatmul.bf16.gmra.mxu0 %v619
    %v630 = vpop.f32.mrf.mxu0
    %v631 = vadd.f32 0.0, %v630
    %v632 = vpop.f32.mrf.mxu0
    %633 = vdwg.mxu0
    %v635 = vrot.slane %v613, 3
    %636 = vrot.lane.b32.xlu0 %v635, 32
    %v637 = vpop.permute.xlu0 %636
    %v639 = vsel %vm121, %v637, 0
    %641 = vmatpush.bf16.msra.mxu0 0
    %642 = vmatpush.bf16.msra.mxu0 0
    %643 = vmatpush.bf16.msra.mxu0 0
    %644 = vmatpush.bf16.msra.mxu0 0
    %645 = vmatpush.bf16.msra.mxu0 0
    %646 = vmatpush.bf16.msra.mxu0 0
    %647 = vmatpush.bf16.msra.mxu0 %v217
    %648 = vmatpush.bf16.msra.mxu0 %v216
    %649 = vmatmul.bf16.gmra.mxu0 %v639
    %v650 = vpop.f32.mrf.mxu0
    %v651 = vadd.f32 %v631, %v650
    %v652 = vpop.f32.mrf.mxu0
    %653 = vdwg.mxu0
    %v654 = vadd.f32 %v651, %v236
    %v655 = vxor.u32 %v654, 2147483648
    %v656 = vmul.f32 %v655, 1.442695
    %v657 = vpow.pop %v656
    %v658 = vadd.f32 %v657, 1.0
    %v659 = vrcp.pop %v658
    %v660 = vmul.f32 %v658, %v659
    %v661 = vsub.f32 1.0, %v660
    %v662 = vmul.f32 %v659, %v661
    %v663 = vadd.f32 %v659, %v662
    %vm664 = vweird.f32 %v658
    %vm665 = vweird.f32 %v659
    %vm666 = vmor %vm664, %vm665
    %v667 = vsel %vm666, %v659, %v663
    %v668 = vand.u32 2147483647, %v658
    %vm669 = vcmp.eq.f32.partialorder %v668, 8.507059e+37
    %v670 = vand.u32 %v658, 2147483648
    %v671 = vor.u32 1.1754944e-38, %v670
    %v672 = vsel %vm669, %v671, %v667
    %v673 = vmul.f32 1.0, %v672
    %v674 = vmul.f32 %v673, 2.0
    %v675 = vsub.f32 %v674, 1.0
    %v676 = vmul.f32 %v673, %v547
    %678 = vrot.lane.b32.xlu0 %v675, 64
    %v679 = vpop.permute.xlu0 %678
    %v681 = vmul.f32 %v673, %v679
    %683 = vrot.lane.b32.xlu0 %v681, 32
    %v684 = vpop.permute.xlu0 %683
    %v686 = vadd.f32 %v676, %v684
    %v687 = vtanh.pop %v686
    %689 = vrot.lane.b32.xlu0 %v687, 64
    %v690 = vpop.permute.xlu0 %689
    %v692 = vmul.f32 %v673, %v690
    %693 = vmatpush.bf16.msra.mxu0 0
    %694 = vmatpush.bf16.msra.mxu0 0
    %695 = vmatpush.bf16.msra.mxu0 0
    %696 = vmatpush.bf16.msra.mxu0 0
    %697 = vmatpush.bf16.msra.mxu0 0
    %698 = vmatpush.bf16.msra.mxu0 0
    %699 = vmatpush.bf16.msra.mxu0 %v118
    %700 = vmatpush.bf16.msra.mxu0 %v117
    %701 = vmatmul.bf16.gmra.mxu0 %v639
    %v702 = vpop.f32.mrf.mxu0
    %v703 = vadd.f32 0.0, %v702
    %v704 = vpop.f32.mrf.mxu0
    %705 = vdwg.mxu0
    %v706 = vadd.f32 %v107, %v703
    %v707 = vadd.f32 %v706, %v139
    %v708 = vxor.u32 %v707, 2147483648
    %v709 = vmul.f32 %v708, 1.442695
    %v710 = vpow.pop %v709
    %v711 = vadd.f32 %v710, 1.0
    %v712 = vrcp.pop %v711
    %v713 = vmul.f32 %v711, %v712
    %v714 = vsub.f32 1.0, %v713
    %v715 = vmul.f32 %v712, %v714
    %v716 = vadd.f32 %v712, %v715
    %vm717 = vweird.f32 %v711
    %vm718 = vweird.f32 %v712
    %vm719 = vmor %vm717, %vm718
    %v720 = vsel %vm719, %v712, %v716
    %v721 = vand.u32 2147483647, %v711
    %vm722 = vcmp.eq.f32.partialorder %v721, 8.507059e+37
    %v723 = vand.u32 %v711, 2147483648
    %v724 = vor.u32 1.1754944e-38, %v723
    %v725 = vsel %vm722, %v724, %v720
    %v726 = vmul.f32 1.0, %v725
    %v727 = vmul.f32 %v726, 2.0
    %v728 = vsub.f32 %v727, 1.0
    %v730 = vrot.slane %v606, 6
    %v732 = vmul.f32 %v726, %v730
    %734 = vrot.lane.b32.xlu0 %v728, 64
    %v735 = vpop.permute.xlu0 %734
    %v737 = vmul.f32 %v726, %v735
    %739 = vrot.lane.b32.xlu0 %v737, 32
    %v740 = vpop.permute.xlu0 %739
    %v742 = vadd.f32 %v732, %v740
    %v743 = vtanh.pop %v742
    %745 = vrot.lane.b32.xlu0 %v743, 64
    %v746 = vpop.permute.xlu0 %745
    %v748 = vmul.f32 %v726, %v746
    %v749 = vpack.c.bf16 %v748, %v748
    %v750 = vpack.c.bf16 %v692, %v692
    %752 = vrot.lane.b32.xlu0 %v750, 32
    %v753 = vpop.permute.xlu0 %752
    %v755 = vsel %vm121, %v753, 0
    %757 = vmatpush.bf16.msra.mxu0 0
    %758 = vmatpush.bf16.msra.mxu0 0
    %759 = vmatpush.bf16.msra.mxu0 0
    %760 = vmatpush.bf16.msra.mxu0 0
    %761 = vmatpush.bf16.msra.mxu0 0
    %762 = vmatpush.bf16.msra.mxu0 0
    %763 = vmatpush.bf16.msra.mxu0 %v189
    %764 = vmatpush.bf16.msra.mxu0 %v188
    %765 = vmatmul.bf16.gmra.mxu0 %v755
    %v766 = vpop.f32.mrf.mxu0
    %v767 = vadd.f32 0.0, %v766
    %v768 = vpop.f32.mrf.mxu0
    %769 = vdwg.mxu0
    %771 = vrot.lane.b32.xlu0 %v749, 32
    %v772 = vpop.permute.xlu0 %771
    %v774 = vsel %vm121, %v772, 0
    %776 = vmatpush.bf16.msra.mxu0 0
    %777 = vmatpush.bf16.msra.mxu0 0
    %778 = vmatpush.bf16.msra.mxu0 0
    %779 = vmatpush.bf16.msra.mxu0 0
    %780 = vmatpush.bf16.msra.mxu0 0
    %781 = vmatpush.bf16.msra.mxu0 0
    %782 = vmatpush.bf16.msra.mxu0 %v217
    %783 = vmatpush.bf16.msra.mxu0 %v216
    %784 = vmatmul.bf16.gmra.mxu0 %v774
    %v785 = vpop.f32.mrf.mxu0
    %v786 = vadd.f32 %v767, %v785
    %v787 = vpop.f32.mrf.mxu0
    %788 = vdwg.mxu0
    %v789 = vadd.f32 %v786, %v236
    %v790 = vxor.u32 %v789, 2147483648
    %v791 = vmul.f32 %v790, 1.442695
    %v792 = vpow.pop %v791
    %v793 = vadd.f32 %v792, 1.0
    %v794 = vrcp.pop %v793
    %v795 = vmul.f32 %v793, %v794
    %v796 = vsub.f32 1.0, %v795
    %v797 = vmul.f32 %v794, %v796
    %v798 = vadd.f32 %v794, %v797
    %vm799 = vweird.f32 %v793
    %vm800 = vweird.f32 %v794
    %vm801 = vmor %vm799, %vm800
    %v802 = vsel %vm801, %v794, %v798
    %v803 = vand.u32 2147483647, %v793
    %vm804 = vcmp.eq.f32.partialorder %v803, 8.507059e+37
    %v805 = vand.u32 %v793, 2147483648
    %v806 = vor.u32 1.1754944e-38, %v805
    %v807 = vsel %vm804, %v806, %v802
    %v808 = vmul.f32 1.0, %v807
    %v809 = vmul.f32 %v808, 2.0
    %v810 = vsub.f32 %v809, 1.0
    %v811 = vmul.f32 %v808, %v686
    %813 = vrot.lane.b32.xlu0 %v810, 64
    %v814 = vpop.permute.xlu0 %813
    %v816 = vmul.f32 %v808, %v814
    %818 = vrot.lane.b32.xlu0 %v816, 32
    %v819 = vpop.permute.xlu0 %818
    %v821 = vadd.f32 %v811, %v819
    %v822 = vtanh.pop %v821
    %824 = vrot.lane.b32.xlu0 %v822, 64
    %v825 = vpop.permute.xlu0 %824
    %v827 = vmul.f32 %v808, %v825
    %828 = vmatpush.bf16.msra.mxu0 0
    %829 = vmatpush.bf16.msra.mxu0 0
    %830 = vmatpush.bf16.msra.mxu0 0
    %831 = vmatpush.bf16.msra.mxu0 0
    %832 = vmatpush.bf16.msra.mxu0 0
    %833 = vmatpush.bf16.msra.mxu0 0
    %834 = vmatpush.bf16.msra.mxu0 %v118
    %835 = vmatpush.bf16.msra.mxu0 %v117
    %836 = vmatmul.bf16.gmra.mxu0 %v774
    %v837 = vpop.f32.mrf.mxu0
    %v838 = vadd.f32 0.0, %v837
    %v839 = vpop.f32.mrf.mxu0
    %840 = vdwg.mxu0
    %v842 = vrot.slane %v838, 6
    %v844 = vadd.f32 %v107, %v842
    %v845 = vadd.f32 %v844, %v139
    %v846 = vxor.u32 %v845, 2147483648
    %v847 = vmul.f32 %v846, 1.442695
    %v848 = vpow.pop %v847
    %v849 = vadd.f32 %v848, 1.0
    %v850 = vrcp.pop %v849
    %v851 = vmul.f32 %v849, %v850
    %v852 = vsub.f32 1.0, %v851
    %v853 = vmul.f32 %v850, %v852
    %v854 = vadd.f32 %v850, %v853
    %vm855 = vweird.f32 %v849
    %vm856 = vweird.f32 %v850
    %vm857 = vmor %vm855, %vm856
    %v858 = vsel %vm857, %v850, %v854
    %v859 = vand.u32 2147483647, %v849
    %vm860 = vcmp.eq.f32.partialorder %v859, 8.507059e+37
    %v861 = vand.u32 %v849, 2147483648
    %v862 = vor.u32 1.1754944e-38, %v861
    %v863 = vsel %vm860, %v862, %v858
    %v864 = vmul.f32 1.0, %v863
    %v865 = vmul.f32 %v864, 2.0
    %v866 = vsub.f32 %v865, 1.0
    %v868 = vrot.slane %v742, 6
    %v870 = vmul.f32 %v864, %v868
    %872 = vrot.lane.b32.xlu0 %v866, 64
    %v873 = vpop.permute.xlu0 %872
    %v875 = vmul.f32 %v864, %v873
    %877 = vrot.lane.b32.xlu0 %v875, 32
    %v878 = vpop.permute.xlu0 %877
    %v880 = vadd.f32 %v870, %v878
    %v881 = vtanh.pop %v880
    %883 = vrot.lane.b32.xlu0 %v881, 64
    %v884 = vpop.permute.xlu0 %883
    %v886 = vmul.f32 %v864, %v884
    %v887 = vpack.c.bf16 %v886, %v886
    %v888 = vpack.c.bf16 %v827, %v827
    %890 = vrot.lane.b32.xlu0 %v888, 32
    %v891 = vpop.permute.xlu0 %890
    %v893 = vsel %vm121, %v891, 0
    %895 = vmatpush.bf16.msra.mxu0 0
    %896 = vmatpush.bf16.msra.mxu0 0
    %897 = vmatpush.bf16.msra.mxu0 0
    %898 = vmatpush.bf16.msra.mxu0 0
    %899 = vmatpush.bf16.msra.mxu0 0
    %900 = vmatpush.bf16.msra.mxu0 0
    %901 = vmatpush.bf16.msra.mxu0 %v189
    %902 = vmatpush.bf16.msra.mxu0 %v188
    %903 = vmatmul.bf16.gmra.mxu0 %v893
    %v904 = vpop.f32.mrf.mxu0
    %v905 = vadd.f32 0.0, %v904
    %v906 = vpop.f32.mrf.mxu0
    %907 = vdwg.mxu0
    %v909 = vrot.slane %v887, 1
    %910 = vrot.lane.b32.xlu0 %v909, 32
    %v911 = vpop.permute.xlu0 %910
    %v913 = vsel %vm121, %v911, 0
    %915 = vmatpush.bf16.msra.mxu0 0
    %916 = vmatpush.bf16.msra.mxu0 0
    %917 = vmatpush.bf16.msra.mxu0 0
    %918 = vmatpush.bf16.msra.mxu0 0
    %919 = vmatpush.bf16.msra.mxu0 0
    %920 = vmatpush.bf16.msra.mxu0 0
    %921 = vmatpush.bf16.msra.mxu0 %v217
    %922 = vmatpush.bf16.msra.mxu0 %v216
    %923 = vmatmul.bf16.gmra.mxu0 %v913
    %v924 = vpop.f32.mrf.mxu0
    %v925 = vadd.f32 %v905, %v924
    %v926 = vpop.f32.mrf.mxu0
    %927 = vdwg.mxu0
    %v928 = vadd.f32 %v925, %v236
    %v929 = vxor.u32 %v928, 2147483648
    %v930 = vmul.f32 %v929, 1.442695
    %v931 = vpow.pop %v930
    %v932 = vadd.f32 %v931, 1.0
    %v933 = vrcp.pop %v932
    %v934 = vmul.f32 %v932, %v933
    %v935 = vsub.f32 1.0, %v934
    %v936 = vmul.f32 %v933, %v935
    %v937 = vadd.f32 %v933, %v936
    %vm938 = vweird.f32 %v932
    %vm939 = vweird.f32 %v933
    %vm940 = vmor %vm938, %vm939
    %v941 = vsel %vm940, %v933, %v937
    %v942 = vand.u32 2147483647, %v932
    %vm943 = vcmp.eq.f32.partialorder %v942, 8.507059e+37
    %v944 = vand.u32 %v932, 2147483648
    %v945 = vor.u32 1.1754944e-38, %v944
    %v946 = vsel %vm943, %v945, %v941
    %v947 = vmul.f32 1.0, %v946
    %v948 = vmul.f32 %v947, 2.0
    %v949 = vsub.f32 %v948, 1.0
    %v950 = vmul.f32 %v947, %v821
    %952 = vrot.lane.b32.xlu0 %v949, 64
    %v953 = vpop.permute.xlu0 %952
    %v955 = vmul.f32 %v947, %v953
    %957 = vrot.lane.b32.xlu0 %v955, 32
    %v958 = vpop.permute.xlu0 %957
    %v960 = vadd.f32 %v950, %v958
    %v961 = vtanh.pop %v960
    %963 = vrot.lane.b32.xlu0 %v961, 64
    %v964 = vpop.permute.xlu0 %963
    %v966 = vmul.f32 %v947, %v964
    %967 = vmatpush.bf16.msra.mxu0 0
    %968 = vmatpush.bf16.msra.mxu0 0
    %969 = vmatpush.bf16.msra.mxu0 0
    %970 = vmatpush.bf16.msra.mxu0 0
    %971 = vmatpush.bf16.msra.mxu0 0
    %972 = vmatpush.bf16.msra.mxu0 0
    %973 = vmatpush.bf16.msra.mxu0 %v118
    %974 = vmatpush.bf16.msra.mxu0 %v117
    %975 = vmatmul.bf16.gmra.mxu0 %v913
    %v976 = vpop.f32.mrf.mxu0
    %v977 = vadd.f32 0.0, %v976
    %v978 = vpop.f32.mrf.mxu0
    %979 = vdwg.mxu0
    %v981 = vrot.slane %v977, 4
    %v983 = vadd.f32 %v107, %v981
    %v984 = vadd.f32 %v983, %v139
    %v985 = vxor.u32 %v984, 2147483648
    %v986 = vmul.f32 %v985, 1.442695
    %v987 = vpow.pop %v986
    %v988 = vadd.f32 %v987, 1.0
    %v989 = vrcp.pop %v988
    %v990 = vmul.f32 %v988, %v989
    %v991 = vsub.f32 1.0, %v990
    %v992 = vmul.f32 %v989, %v991
    %v993 = vadd.f32 %v989, %v992
    %vm994 = vweird.f32 %v988
    %vm995 = vweird.f32 %v989
    %vm996 = vmor %vm994, %vm995
    %v997 = vsel %vm996, %v989, %v993
    %v998 = vand.u32 2147483647, %v988
    %vm999 = vcmp.eq.f32.partialorder %v998, 8.507059e+37
    %v1000 = vand.u32 %v988, 2147483648
    %v1001 = vor.u32 1.1754944e-38, %v1000
    %v1002 = vsel %vm999, %v1001, %v997
    %v1003 = vmul.f32 1.0, %v1002
    %v1004 = vmul.f32 %v1003, 2.0
    %v1005 = vsub.f32 %v1004, 1.0
    %v1007 = vrot.slane %v880, 6
    %v1009 = vmul.f32 %v1003, %v1007
    %1011 = vrot.lane.b32.xlu0 %v1005, 64
    %v1012 = vpop.permute.xlu0 %1011
    %v1014 = vmul.f32 %v1003, %v1012
    %1016 = vrot.lane.b32.xlu0 %v1014, 32
    %v1017 = vpop.permute.xlu0 %1016
    %v1019 = vadd.f32 %v1009, %v1017
    %v1020 = vtanh.pop %v1019
    %1022 = vrot.lane.b32.xlu0 %v1020, 64
    %v1023 = vpop.permute.xlu0 %1022
    %v1025 = vmul.f32 %v1003, %v1023
    %v1026 = vpack.c.bf16 %v1025, %v1025
    %v1027 = vpack.c.bf16 %v966, %v966
    %1029 = vrot.lane.b32.xlu0 %v1027, 32
    %v1030 = vpop.permute.xlu0 %1029
    %v1032 = vsel %vm121, %v1030, 0
    %1034 = vmatpush.bf16.msra.mxu0 0
    %1035 = vmatpush.bf16.msra.mxu0 0
    %1036 = vmatpush.bf16.msra.mxu0 0
    %1037 = vmatpush.bf16.msra.mxu0 0
    %1038 = vmatpush.bf16.msra.mxu0 0
    %1039 = vmatpush.bf16.msra.mxu0 0
    %1040 = vmatpush.bf16.msra.mxu0 %v189
    %1041 = vmatpush.bf16.msra.mxu0 %v188
    %1042 = vmatmul.bf16.gmra.mxu0 %v1032
    %v1043 = vpop.f32.mrf.mxu0
    %v1044 = vadd.f32 0.0, %v1043
    %v1045 = vpop.f32.mrf.mxu0
    %1046 = vdwg.mxu0
    %v1048 = vrot.slane %v1026, 2
    %1049 = vrot.lane.b32.xlu0 %v1048, 32
    %v1050 = vpop.permute.xlu0 %1049
    %v1052 = vsel %vm121, %v1050, 0
    %1054 = vmatpush.bf16.msra.mxu0 0
    %1055 = vmatpush.bf16.msra.mxu0 0
    %1056 = vmatpush.bf16.msra.mxu0 0
    %1057 = vmatpush.bf16.msra.mxu0 0
    %1058 = vmatpush.bf16.msra.mxu0 0
    %1059 = vmatpush.bf16.msra.mxu0 0
    %1060 = vmatpush.bf16.msra.mxu0 %v217
    %1061 = vmatpush.bf16.msra.mxu0 %v216
    %1062 = vmatmul.bf16.gmra.mxu0 %v1052
    %v1063 = vpop.f32.mrf.mxu0
    %v1064 = vadd.f32 %v1044, %v1063
    %v1065 = vpop.f32.mrf.mxu0
    %1066 = vdwg.mxu0
    %v1067 = vadd.f32 %v1064, %v236
    %v1068 = vxor.u32 %v1067, 2147483648
    %v1069 = vmul.f32 %v1068, 1.442695
    %v1070 = vpow.pop %v1069
    %v1071 = vadd.f32 %v1070, 1.0
    %v1072 = vrcp.pop %v1071
    %v1073 = vmul.f32 %v1071, %v1072
    %v1074 = vsub.f32 1.0, %v1073
    %v1075 = vmul.f32 %v1072, %v1074
    %v1076 = vadd.f32 %v1072, %v1075
    %vm1077 = vweird.f32 %v1071
    %vm1078 = vweird.f32 %v1072
    %vm1079 = vmor %vm1077, %vm1078
    %v1080 = vsel %vm1079, %v1072, %v1076
    %v1081 = vand.u32 2147483647, %v1071
    %vm1082 = vcmp.eq.f32.partialorder %v1081, 8.507059e+37
    %v1083 = vand.u32 %v1071, 2147483648
    %v1084 = vor.u32 1.1754944e-38, %v1083
    %v1085 = vsel %vm1082, %v1084, %v1080
    %v1086 = vmul.f32 1.0, %v1085
    %v1087 = vmul.f32 %v1086, 2.0
    %v1088 = vsub.f32 %v1087, 1.0
    %v1089 = vmul.f32 %v1086, %v960
    %1091 = vrot.lane.b32.xlu0 %v1088, 64
    %v1092 = vpop.permute.xlu0 %1091
    %v1094 = vmul.f32 %v1086, %v1092
    %1096 = vrot.lane.b32.xlu0 %v1094, 32
    %v1097 = vpop.permute.xlu0 %1096
    %v1099 = vadd.f32 %v1089, %v1097
    %v1100 = vtanh.pop %v1099
    %1102 = vrot.lane.b32.xlu0 %v1100, 64
    %v1103 = vpop.permute.xlu0 %1102
    %v1105 = vmul.f32 %v1086, %v1103
    %1106 = vmatpush.bf16.msra.mxu0 0
    %1107 = vmatpush.bf16.msra.mxu0 0
    %1108 = vmatpush.bf16.msra.mxu0 0
    %1109 = vmatpush.bf16.msra.mxu0 0
    %1110 = vmatpush.bf16.msra.mxu0 0
    %1111 = vmatpush.bf16.msra.mxu0 0
    %1112 = vmatpush.bf16.msra.mxu0 %v118
    %1113 = vmatpush.bf16.msra.mxu0 %v117
    %1114 = vmatmul.bf16.gmra.mxu0 %v1052
    %v1115 = vpop.f32.mrf.mxu0
    %v1116 = vadd.f32 0.0, %v1115
    %v1117 = vpop.f32.mrf.mxu0
    %1118 = vdwg.mxu0
    %v1120 = vrot.slane %v1116, 2
    %v1122 = vadd.f32 %v107, %v1120
    %v1123 = vadd.f32 %v1122, %v139
    %v1124 = vxor.u32 %v1123, 2147483648
    %v1125 = vmul.f32 %v1124, 1.442695
    %v1126 = vpow.pop %v1125
    %v1127 = vadd.f32 %v1126, 1.0
    %v1128 = vrcp.pop %v1127
    %v1129 = vmul.f32 %v1127, %v1128
    %v1130 = vsub.f32 1.0, %v1129
    %v1131 = vmul.f32 %v1128, %v1130
    %v1132 = vadd.f32 %v1128, %v1131
    %vm1133 = vweird.f32 %v1127
    %vm1134 = vweird.f32 %v1128
    %vm1135 = vmor %vm1133, %vm1134
    %v1136 = vsel %vm1135, %v1128, %v1132
    %v1137 = vand.u32 2147483647, %v1127
    %vm1138 = vcmp.eq.f32.partialorder %v1137, 8.507059e+37
    %v1139 = vand.u32 %v1127, 2147483648
    %v1140 = vor.u32 1.1754944e-38, %v1139
    %v1141 = vsel %vm1138, %v1140, %v1136
    %v1142 = vmul.f32 1.0, %v1141
    %v1143 = vmul.f32 %v1142, 2.0
    %v1144 = vsub.f32 %v1143, 1.0
    %v1146 = vrot.slane %v1019, 6
    %v1148 = vmul.f32 %v1142, %v1146
    %1150 = vrot.lane.b32.xlu0 %v1144, 64
    %v1151 = vpop.permute.xlu0 %1150
    %v1153 = vmul.f32 %v1142, %v1151
    %1155 = vrot.lane.b32.xlu0 %v1153, 32
    %v1156 = vpop.permute.xlu0 %1155
    %v1158 = vadd.f32 %v1148, %v1156
    %v1159 = vtanh.pop %v1158
    %1161 = vrot.lane.b32.xlu0 %v1159, 64
    %v1162 = vpop.permute.xlu0 %1161
    %v1164 = vmul.f32 %v1142, %v1162
    %v1165 = vpack.c.bf16 %v1164, %v1164
    %v1166 = vpack.c.bf16 %v1105, %v1105
    %1168 = vrot.lane.b32.xlu0 %v1166, 32
    %v1169 = vpop.permute.xlu0 %1168
    %v1171 = vsel %vm121, %v1169, 0
    %1173 = vmatpush.bf16.msra.mxu0 0
    %1174 = vmatpush.bf16.msra.mxu0 0
    %1175 = vmatpush.bf16.msra.mxu0 0
    %1176 = vmatpush.bf16.msra.mxu0 0
    %1177 = vmatpush.bf16.msra.mxu0 0
    %1178 = vmatpush.bf16.msra.mxu0 0
    %1179 = vmatpush.bf16.msra.mxu0 %v189
    %1180 = vmatpush.bf16.msra.mxu0 %v188
    %1181 = vmatmul.bf16.gmra.mxu0 %v1171
    %v1182 = vpop.f32.mrf.mxu0
    %v1183 = vadd.f32 0.0, %v1182
    %v1184 = vpop.f32.mrf.mxu0
    %1185 = vdwg.mxu0
    %v1187 = vrot.slane %v1165, 3
    %1188 = vrot.lane.b32.xlu0 %v1187, 32
    %v1189 = vpop.permute.xlu0 %1188
    %v1191 = vsel %vm121, %v1189, 0
    %1193 = vmatpush.bf16.msra.mxu0 0
    %1194 = vmatpush.bf16.msra.mxu0 0
    %1195 = vmatpush.bf16.msra.mxu0 0
    %1196 = vmatpush.bf16.msra.mxu0 0
    %1197 = vmatpush.bf16.msra.mxu0 0
    %1198 = vmatpush.bf16.msra.mxu0 0
    %1199 = vmatpush.bf16.msra.mxu0 %v217
    %1200 = vmatpush.bf16.msra.mxu0 %v216
    %1201 = vmatmul.bf16.gmra.mxu0 %v1191
    %v1202 = vpop.f32.mrf.mxu0
    %v1203 = vadd.f32 %v1183, %v1202
    %v1204 = vpop.f32.mrf.mxu0
    %1205 = vdwg.mxu0
    %v1206 = vadd.f32 %v1203, %v236
    %v1207 = vxor.u32 %v1206, 2147483648
    %v1208 = vmul.f32 %v1207, 1.442695
    %v1209 = vpow.pop %v1208
    %v1210 = vadd.f32 %v1209, 1.0
    %v1211 = vrcp.pop %v1210
    %v1212 = vmul.f32 %v1210, %v1211
    %v1213 = vsub.f32 1.0, %v1212
    %v1214 = vmul.f32 %v1211, %v1213
    %v1215 = vadd.f32 %v1211, %v1214
    %vm1216 = vweird.f32 %v1210
    %vm1217 = vweird.f32 %v1211
    %vm1218 = vmor %vm1216, %vm1217
    %v1219 = vsel %vm1218, %v1211, %v1215
    %v1220 = vand.u32 2147483647, %v1210
    %vm1221 = vcmp.eq.f32.partialorder %v1220, 8.507059e+37
    %v1222 = vand.u32 %v1210, 2147483648
    %v1223 = vor.u32 1.1754944e-38, %v1222
    %v1224 = vsel %vm1221, %v1223, %v1219
    %v1225 = vmul.f32 1.0, %v1224
    %v1226 = vmul.f32 %v1225, 2.0
    %v1227 = vsub.f32 %v1226, 1.0
    %v1228 = vmul.f32 %v1225, %v1099
    %1230 = vrot.lane.b32.xlu0 %v1227, 64
    %v1231 = vpop.permute.xlu0 %1230
    %v1233 = vmul.f32 %v1225, %v1231
    %1235 = vrot.lane.b32.xlu0 %v1233, 32
    %v1236 = vpop.permute.xlu0 %1235
    %v1238 = vadd.f32 %v1228, %v1236
    %v1239 = vtanh.pop %v1238
    %1241 = vrot.lane.b32.xlu0 %v1239, 64
    %v1242 = vpop.permute.xlu0 %1241
    %v1244 = vmul.f32 %v1225, %v1242
    %1246 = vset.pattern.permute.xlu0 0
    %1247 = vperm.xlu0 %1246, %v55
    %v1248 = vpop.permute.xlu0 %1247
    %v1250 = vperm.slane %v85, 2
    %v1251 = vmul.f32 %v1248, %v1250
    %v1256 = vunpack.c.l.b16 %v65
    %v1257 = vunpack.c.l.b16 %v66
    %v1258 = vunpack.c.l.b16 %v67
    %v1259 = vunpack.c.l.b16 %v68
    %v1260 = vpack.c.b16 %v1257, %v1256
    %v1261 = vpack.c.b16 %v1259, %v1258
    %1264 = vmatpush.bf16.msra.mxu0 0
    %1265 = vmatpush.bf16.msra.mxu0 0
    %1266 = vmatpush.bf16.msra.mxu0 0
    %1267 = vmatpush.bf16.msra.mxu0 0
    %1268 = vmatpush.bf16.msra.mxu0 0
    %1269 = vmatpush.bf16.msra.mxu0 0
    %1270 = vmatpush.bf16.msra.mxu0 %v1261
    %1271 = vmatpush.bf16.msra.mxu0 %v1260
    %1272 = vmatmul.bf16.gmra.mxu0 %v1191
    %v1273 = vpop.f32.mrf.mxu0
    %v1274 = vadd.f32 0.0, %v1273
    %v1275 = vpop.f32.mrf.mxu0
    %1276 = vdwg.mxu0
    %v1278 = vrot.slane %v1274, 2
    %v1280 = vadd.f32 %v1251, %v1278
    %v1281 = vperm.slane %v85, 3
    %v1282 = vadd.f32 %v1280, %v1281
    %v1283 = vxor.u32 %v1282, 2147483648
    %v1284 = vmul.f32 %v1283, 1.442695
    %v1285 = vpow.pop %v1284
    %v1286 = vadd.f32 %v1285, 1.0
    %v1287 = vrcp.pop %v1286
    %v1288 = vmul.f32 %v1286, %v1287
    %v1289 = vsub.f32 1.0, %v1288
    %v1290 = vmul.f32 %v1287, %v1289
    %v1291 = vadd.f32 %v1287, %v1290
    %vm1292 = vweird.f32 %v1286
    %vm1293 = vweird.f32 %v1287
    %vm1294 = vmor %vm1292, %vm1293
    %v1295 = vsel %vm1294, %v1287, %v1291
    %v1296 = vand.u32 2147483647, %v1286
    %vm1297 = vcmp.eq.f32.partialorder %v1296, 8.507059e+37
    %v1298 = vand.u32 %v1286, 2147483648
    %v1299 = vor.u32 1.1754944e-38, %v1298
    %v1300 = vsel %vm1297, %v1299, %v1295
    %v1301 = vmul.f32 1.0, %v1300
    %v1302 = vmul.f32 %v1301, 2.0
    %v1303 = vsub.f32 %v1302, 1.0
    %v1304 = vmul.f32 %v1301, %v1158
    %1306 = vrot.lane.b32.xlu0 %v1303, 64
    %v1307 = vpop.permute.xlu0 %1306
    %v1309 = vmul.f32 %v1301, %v1307
    %1311 = vrot.lane.b32.xlu0 %v1309, 32
    %v1312 = vpop.permute.xlu0 %1311
    %v1314 = vadd.f32 %v1304, %v1312
    %v1315 = vtanh.pop %v1314
    %1317 = vrot.lane.b32.xlu0 %v1315, 64
    %v1318 = vpop.permute.xlu0 %1317
    %v1320 = vmul.f32 %v1301, %v1318
    %v1321 = vpack.c.bf16 %v1320, %v1320
    %v1322 = vpack.c.bf16 %v1244, %v1244
    %1324 = vrot.lane.b32.xlu0 %v1322, 32
    %v1325 = vpop.permute.xlu0 %1324
    %v1330 = vunpack.c.l.b16 %v69
    %v1331 = vunpack.c.l.b16 %v70
    %v1332 = vunpack.c.l.b16 %v71
    %v1333 = vunpack.c.l.b16 %v72
    %v1334 = vpack.c.b16 %v1331, %v1330
    %v1335 = vpack.c.b16 %v1333, %v1332
    %v1339 = vsel %vm121, %v1325, 0
    %1341 = vmatpush.bf16.msra.mxu0 0
    %1342 = vmatpush.bf16.msra.mxu0 0
    %1343 = vmatpush.bf16.msra.mxu0 0
    %1344 = vmatpush.bf16.msra.mxu0 0
    %1345 = vmatpush.bf16.msra.mxu0 0
    %1346 = vmatpush.bf16.msra.mxu0 0
    %1347 = vmatpush.bf16.msra.mxu0 %v1335
    %1348 = vmatpush.bf16.msra.mxu0 %v1334
    %1349 = vmatmul.bf16.gmra.mxu0 %v1339
    %v1350 = vpop.f32.mrf.mxu0
    %v1351 = vadd.f32 0.0, %v1350
    %v1352 = vpop.f32.mrf.mxu0
    %1353 = vdwg.mxu0
    %v1355 = vrot.slane %v1321, 3
    %1356 = vrot.lane.b32.xlu0 %v1355, 32
    %v1357 = vpop.permute.xlu0 %1356
    %v1362 = vunpack.c.l.b16 %v81
    %v1363 = vunpack.c.l.b16 %v82
    %v1364 = vunpack.c.l.b16 %v83
    %v1365 = vunpack.c.l.b16 %v84
    %v1366 = vpack.c.b16 %v1363, %v1362
    %v1367 = vpack.c.b16 %v1365, %v1364
    %v1371 = vsel %vm121, %v1357, 0
    %1373 = vmatpush.bf16.msra.mxu0 0
    %1374 = vmatpush.bf16.msra.mxu0 0
    %1375 = vmatpush.bf16.msra.mxu0 0
    %1376 = vmatpush.bf16.msra.mxu0 0
    %1377 = vmatpush.bf16.msra.mxu0 0
    %1378 = vmatpush.bf16.msra.mxu0 0
    %1379 = vmatpush.bf16.msra.mxu0 %v1367
    %1380 = vmatpush.bf16.msra.mxu0 %v1366
    %1381 = vmatmul.bf16.gmra.mxu0 %v1371
    %v1382 = vpop.f32.mrf.mxu0
    %v1383 = vadd.f32 %v1351, %v1382
    %v1384 = vpop.f32.mrf.mxu0
    %1385 = vdwg.mxu0
    %v1386 = vperm.slane %v85, 4
    %v1387 = vadd.f32 %v1383, %v1386
    %v1388 = vxor.u32 %v1387, 2147483648
    %v1389 = vmul.f32 %v1388, 1.442695
    %v1390 = vpow.pop %v1389
    %v1391 = vadd.f32 %v1390, 1.0
    %v1392 = vrcp.pop %v1391
    %v1393 = vmul.f32 %v1391, %v1392
    %v1394 = vsub.f32 1.0, %v1393
    %v1395 = vmul.f32 %v1392, %v1394
    %v1396 = vadd.f32 %v1392, %v1395
    %vm1397 = vweird.f32 %v1391
    %vm1398 = vweird.f32 %v1392
    %vm1399 = vmor %vm1397, %vm1398
    %v1400 = vsel %vm1399, %v1392, %v1396
    %v1401 = vand.u32 2147483647, %v1391
    %vm1402 = vcmp.eq.f32.partialorder %v1401, 8.507059e+37
    %v1403 = vand.u32 %v1391, 2147483648
    %v1404 = vor.u32 1.1754944e-38, %v1403
    %v1405 = vsel %vm1402, %v1404, %v1400
    %v1406 = vmul.f32 1.0, %v1405
    %v1407 = vmul.f32 %v1406, 2.0
    %v1408 = vsub.f32 %v1407, 1.0
    %v1409 = vmul.f32 %v1406, %v1238
    %1411 = vrot.lane.b32.xlu0 %v1408, 64
    %v1412 = vpop.permute.xlu0 %1411
    %v1414 = vmul.f32 %v1406, %v1412
    %1416 = vrot.lane.b32.xlu0 %v1414, 32
    %v1417 = vpop.permute.xlu0 %1416
    %v1419 = vadd.f32 %v1409, %v1417
    %v1420 = vtanh.pop %v1419
    %1422 = vrot.lane.b32.xlu0 %v1420, 64
    %v1423 = vpop.permute.xlu0 %1422
    %v1425 = vmul.f32 %v1406, %v1423
    %v1426 = vpack.c.bf16 %v1425, %v1425
    %v1427 = vperm.slane %v85, 5
    %1429 = vrot.lane.b32.xlu0 %v1426, 32
    %v1430 = vpop.permute.xlu0 %1429
    %v1435 = vunpack.c.l.b16 %v73
    %v1436 = vunpack.c.l.b16 %v74
    %v1437 = vunpack.c.l.b16 %v75
    %v1438 = vunpack.c.l.b16 %v76
    %v1439 = vpack.c.b16 %v1436, %v1435
    %v1440 = vpack.c.b16 %v1438, %v1437
    %v1444 = vsel %vm121, %v1430, 0
    %1446 = vmatpush.bf16.msra.mxu0 0
    %1447 = vmatpush.bf16.msra.mxu0 0
    %1448 = vmatpush.bf16.msra.mxu0 0
    %1449 = vmatpush.bf16.msra.mxu0 0
    %1450 = vmatpush.bf16.msra.mxu0 0
    %1451 = vmatpush.bf16.msra.mxu0 0
    %1452 = vmatpush.bf16.msra.mxu0 %v1440
    %1453 = vmatpush.bf16.msra.mxu0 %v1439
    %1454 = vmatmul.bf16.gmra.mxu0 %v1444
    %v1455 = vpop.f32.mrf.mxu0
    %v1456 = vadd.f32 %v1427, %v1455
    %v1457 = vpop.f32.mrf.mxu0
    %1458 = vdwg.mxu0
    %v1459 = vxor.u32 %v1456, 2147483648
    %v1460 = vmul.f32 %v1459, 1.442695
    %v1461 = vpow.pop %v1460
    %v1462 = vadd.f32 %v1461, 1.0
    %v1463 = vrcp.pop %v1462
    %v1464 = vmul.f32 %v1462, %v1463
    %v1465 = vsub.f32 1.0, %v1464
    %v1466 = vmul.f32 %v1463, %v1465
    %v1467 = vadd.f32 %v1463, %v1466
    %vm1468 = vweird.f32 %v1462
    %vm1469 = vweird.f32 %v1463
    %vm1470 = vmor %vm1468, %vm1469
    %v1471 = vsel %vm1470, %v1463, %v1467
    %v1472 = vand.u32 2147483647, %v1462
    %vm1473 = vcmp.eq.f32.partialorder %v1472, 8.507059e+37
    %v1474 = vand.u32 %v1462, 2147483648
    %v1475 = vor.u32 1.1754944e-38, %v1474
    %v1476 = vsel %vm1473, %v1475, %v1471
    %v1477 = vmul.f32 1.0, %v1476
    %v1478 = vmul.f32 %v1477, %v1250
    %1479 = vmatpush.bf16.msra.mxu0 0
    %1480 = vmatpush.bf16.msra.mxu0 0
    %1481 = vmatpush.bf16.msra.mxu0 0
    %1482 = vmatpush.bf16.msra.mxu0 0
    %1483 = vmatpush.bf16.msra.mxu0 0
    %1484 = vmatpush.bf16.msra.mxu0 0
    %1485 = vmatpush.bf16.msra.mxu0 %v1261
    %1486 = vmatpush.bf16.msra.mxu0 %v1260
    %1487 = vmatmul.bf16.gmra.mxu0 %v1371
    %v1488 = vpop.f32.mrf.mxu0
    %v1489 = vadd.f32 0.0, %v1488
    %v1490 = vpop.f32.mrf.mxu0
    %1491 = vdwg.mxu0
    %v1492 = vadd.f32 %v1478, %v1489
    %v1493 = vadd.f32 %v1492, %v1281
    %v1494 = vxor.u32 %v1493, 2147483648
    %v1495 = vmul.f32 %v1494, 1.442695
    %v1496 = vpow.pop %v1495
    %v1497 = vadd.f32 %v1496, 1.0
    %v1498 = vrcp.pop %v1497
    %v1499 = vmul.f32 %v1497, %v1498
    %v1500 = vsub.f32 1.0, %v1499
    %v1501 = vmul.f32 %v1498, %v1500
    %v1502 = vadd.f32 %v1498, %v1501
    %vm1503 = vweird.f32 %v1497
    %vm1504 = vweird.f32 %v1498
    %vm1505 = vmor %vm1503, %vm1504
    %v1506 = vsel %vm1505, %v1498, %v1502
    %v1507 = vand.u32 2147483647, %v1497
    %vm1508 = vcmp.eq.f32.partialorder %v1507, 8.507059e+37
    %v1509 = vand.u32 %v1497, 2147483648
    %v1510 = vor.u32 1.1754944e-38, %v1509
    %v1511 = vsel %vm1508, %v1510, %v1506
    %v1512 = vmul.f32 1.0, %v1511
    %v1513 = vmul.f32 %v1512, 2.0
    %v1514 = vsub.f32 %v1513, 1.0
    %v1516 = vrot.slane %v1314, 6
    %v1518 = vmul.f32 %v1512, %v1516
    %1520 = vrot.lane.b32.xlu0 %v1514, 64
    %v1521 = vpop.permute.xlu0 %1520
    %v1523 = vmul.f32 %v1512, %v1521
    %1525 = vrot.lane.b32.xlu0 %v1523, 32
    %v1526 = vpop.permute.xlu0 %1525
    %v1528 = vadd.f32 %v1518, %v1526
    %v1529 = vtanh.pop %v1528
    %1531 = vrot.lane.b32.xlu0 %v1529, 64
    %v1532 = vpop.permute.xlu0 %1531
    %v1534 = vmul.f32 %v1512, %v1532
    %v1535 = vpack.c.bf16 %v1534, %v1534
    %1536 = vmatpush.bf16.msra.mxu0 0
    %1537 = vmatpush.bf16.msra.mxu0 0
    %1538 = vmatpush.bf16.msra.mxu0 0
    %1539 = vmatpush.bf16.msra.mxu0 0
    %1540 = vmatpush.bf16.msra.mxu0 0
    %1541 = vmatpush.bf16.msra.mxu0 0
    %1542 = vmatpush.bf16.msra.mxu0 %v1335
    %1543 = vmatpush.bf16.msra.mxu0 %v1334
    %1544 = vmatmul.bf16.gmra.mxu0 %v1444
    %v1545 = vpop.f32.mrf.mxu0
    %v1546 = vadd.f32 0.0, %v1545
    %v1547 = vpop.f32.mrf.mxu0
    %1548 = vdwg.mxu0
    %1550 = vrot.lane.b32.xlu0 %v1535, 32
    %v1551 = vpop.permute.xlu0 %1550
    %v1553 = vsel %vm121, %v1551, 0
    %1555 = vmatpush.bf16.msra.mxu0 0
    %1556 = vmatpush.bf16.msra.mxu0 0
    %1557 = vmatpush.bf16.msra.mxu0 0
    %1558 = vmatpush.bf16.msra.mxu0 0
    %1559 = vmatpush.bf16.msra.mxu0 0
    %1560 = vmatpush.bf16.msra.mxu0 0
    %1561 = vmatpush.bf16.msra.mxu0 %v1367
    %1562 = vmatpush.bf16.msra.mxu0 %v1366
    %1563 = vmatmul.bf16.gmra.mxu0 %v1553
    %v1564 = vpop.f32.mrf.mxu0
    %v1565 = vadd.f32 %v1546, %v1564
    %v1566 = vpop.f32.mrf.mxu0
    %1567 = vdwg.mxu0
    %v1568 = vadd.f32 %v1565, %v1386
    %v1569 = vxor.u32 %v1568, 2147483648
    %v1570 = vmul.f32 %v1569, 1.442695
    %v1571 = vpow.pop %v1570
    %v1572 = vadd.f32 %v1571, 1.0
    %v1573 = vrcp.pop %v1572
    %v1574 = vmul.f32 %v1572, %v1573
    %v1575 = vsub.f32 1.0, %v1574
    %v1576 = vmul.f32 %v1573, %v1575
    %v1577 = vadd.f32 %v1573, %v1576
    %vm1578 = vweird.f32 %v1572
    %vm1579 = vweird.f32 %v1573
    %vm1580 = vmor %vm1578, %vm1579
    %v1581 = vsel %vm1580, %v1573, %v1577
    %v1582 = vand.u32 2147483647, %v1572
    %vm1583 = vcmp.eq.f32.partialorder %v1582, 8.507059e+37
    %v1584 = vand.u32 %v1572, 2147483648
    %v1585 = vor.u32 1.1754944e-38, %v1584
    %v1586 = vsel %vm1583, %v1585, %v1581
    %v1587 = vmul.f32 1.0, %v1586
    %v1588 = vmul.f32 %v1587, 2.0
    %v1589 = vsub.f32 %v1588, 1.0
    %v1590 = vmul.f32 %v1587, %v1419
    %1592 = vrot.lane.b32.xlu0 %v1589, 64
    %v1593 = vpop.permute.xlu0 %1592
    %v1595 = vmul.f32 %v1587, %v1593
    %1597 = vrot.lane.b32.xlu0 %v1595, 32
    %v1598 = vpop.permute.xlu0 %1597
    %v1600 = vadd.f32 %v1590, %v1598
    %v1601 = vtanh.pop %v1600
    %1603 = vrot.lane.b32.xlu0 %v1601, 64
    %v1604 = vpop.permute.xlu0 %1603
    %v1606 = vmul.f32 %v1587, %v1604
    %v1607 = vpack.c.bf16 %v1606, %v1606
    %1609 = vrot.lane.b32.xlu0 %v1607, 32
    %v1610 = vpop.permute.xlu0 %1609
    %v1612 = vsel %vm121, %v1610, 0
    %1614 = vmatpush.bf16.msra.mxu0 0
    %1615 = vmatpush.bf16.msra.mxu0 0
    %1616 = vmatpush.bf16.msra.mxu0 0
    %1617 = vmatpush.bf16.msra.mxu0 0
    %1618 = vmatpush.bf16.msra.mxu0 0
    %1619 = vmatpush.bf16.msra.mxu0 0
    %1620 = vmatpush.bf16.msra.mxu0 %v1440
    %1621 = vmatpush.bf16.msra.mxu0 %v1439
    %1622 = vmatmul.bf16.gmra.mxu0 %v1612
    %v1623 = vpop.f32.mrf.mxu0
    %v1624 = vadd.f32 %v1427, %v1623
    %v1625 = vpop.f32.mrf.mxu0
    %1626 = vdwg.mxu0
    %v1627 = vxor.u32 %v1624, 2147483648
    %v1628 = vmul.f32 %v1627, 1.442695
    %v1629 = vpow.pop %v1628
    %v1630 = vadd.f32 %v1629, 1.0
    %v1631 = vrcp.pop %v1630
    %v1632 = vmul.f32 %v1630, %v1631
    %v1633 = vsub.f32 1.0, %v1632
    %v1634 = vmul.f32 %v1631, %v1633
    %v1635 = vadd.f32 %v1631, %v1634
    %vm1636 = vweird.f32 %v1630
    %vm1637 = vweird.f32 %v1631
    %vm1638 = vmor %vm1636, %vm1637
    %v1639 = vsel %vm1638, %v1631, %v1635
    %v1640 = vand.u32 2147483647, %v1630
    %vm1641 = vcmp.eq.f32.partialorder %v1640, 8.507059e+37
    %v1642 = vand.u32 %v1630, 2147483648
    %v1643 = vor.u32 1.1754944e-38, %v1642
    %v1644 = vsel %vm1641, %v1643, %v1639
    %v1645 = vmul.f32 1.0, %v1644
    %v1646 = vmul.f32 %v1645, %v1250
    %1647 = vmatpush.bf16.msra.mxu0 0
    %1648 = vmatpush.bf16.msra.mxu0 0
    %1649 = vmatpush.bf16.msra.mxu0 0
    %1650 = vmatpush.bf16.msra.mxu0 0
    %1651 = vmatpush.bf16.msra.mxu0 0
    %1652 = vmatpush.bf16.msra.mxu0 0
    %1653 = vmatpush.bf16.msra.mxu0 %v1261
    %1654 = vmatpush.bf16.msra.mxu0 %v1260
    %1655 = vmatmul.bf16.gmra.mxu0 %v1553
    %v1656 = vpop.f32.mrf.mxu0
    %v1657 = vadd.f32 0.0, %v1656
    %v1658 = vpop.f32.mrf.mxu0
    %1659 = vdwg.mxu0
    %v1660 = vadd.f32 %v1646, %v1657
    %v1661 = vadd.f32 %v1660, %v1281
    %v1662 = vxor.u32 %v1661, 2147483648
    %v1663 = vmul.f32 %v1662, 1.442695
    %v1664 = vpow.pop %v1663
    %v1665 = vadd.f32 %v1664, 1.0
    %v1666 = vrcp.pop %v1665
    %v1667 = vmul.f32 %v1665, %v1666
    %v1668 = vsub.f32 1.0, %v1667
    %v1669 = vmul.f32 %v1666, %v1668
    %v1670 = vadd.f32 %v1666, %v1669
    %vm1671 = vweird.f32 %v1665
    %vm1672 = vweird.f32 %v1666
    %vm1673 = vmor %vm1671, %vm1672
    %v1674 = vsel %vm1673, %v1666, %v1670
    %v1675 = vand.u32 2147483647, %v1665
    %vm1676 = vcmp.eq.f32.partialorder %v1675, 8.507059e+37
    %v1677 = vand.u32 %v1665, 2147483648
    %v1678 = vor.u32 1.1754944e-38, %v1677
    %v1679 = vsel %vm1676, %v1678, %v1674
    %v1680 = vmul.f32 1.0, %v1679
    %v1681 = vmul.f32 %v1680, 2.0
    %v1682 = vsub.f32 %v1681, 1.0
    %v1683 = vmul.f32 %v1680, %v1528
    %1685 = vrot.lane.b32.xlu0 %v1682, 64
    %v1686 = vpop.permute.xlu0 %1685
    %v1688 = vmul.f32 %v1680, %v1686
    %1690 = vrot.lane.b32.xlu0 %v1688, 32
    %v1691 = vpop.permute.xlu0 %1690
    %v1693 = vadd.f32 %v1683, %v1691
    %v1694 = vtanh.pop %v1693
    %1696 = vrot.lane.b32.xlu0 %v1694, 64
    %v1697 = vpop.permute.xlu0 %1696
    %v1699 = vmul.f32 %v1680, %v1697
    %v1700 = vpack.c.bf16 %v1699, %v1699
    %1701 = vmatpush.bf16.msra.mxu0 0
    %1702 = vmatpush.bf16.msra.mxu0 0
    %1703 = vmatpush.bf16.msra.mxu0 0
    %1704 = vmatpush.bf16.msra.mxu0 0
    %1705 = vmatpush.bf16.msra.mxu0 0
    %1706 = vmatpush.bf16.msra.mxu0 0
    %1707 = vmatpush.bf16.msra.mxu0 %v1335
    %1708 = vmatpush.bf16.msra.mxu0 %v1334
    %1709 = vmatmul.bf16.gmra.mxu0 %v1612
    %v1710 = vpop.f32.mrf.mxu0
    %v1711 = vadd.f32 0.0, %v1710
    %v1712 = vpop.f32.mrf.mxu0
    %1713 = vdwg.mxu0
    %1715 = vrot.lane.b32.xlu0 %v1700, 32
    %v1716 = vpop.permute.xlu0 %1715
    %v1718 = vsel %vm121, %v1716, 0
    %1720 = vmatpush.bf16.msra.mxu0 0
    %1721 = vmatpush.bf16.msra.mxu0 0
    %1722 = vmatpush.bf16.msra.mxu0 0
    %1723 = vmatpush.bf16.msra.mxu0 0
    %1724 = vmatpush.bf16.msra.mxu0 0
    %1725 = vmatpush.bf16.msra.mxu0 0
    %1726 = vmatpush.bf16.msra.mxu0 %v1367
    %1727 = vmatpush.bf16.msra.mxu0 %v1366
    %1728 = vmatmul.bf16.gmra.mxu0 %v1718
    %v1729 = vpop.f32.mrf.mxu0
    %v1730 = vadd.f32 %v1711, %v1729
    %v1731 = vpop.f32.mrf.mxu0
    %1732 = vdwg.mxu0
    %v1733 = vadd.f32 %v1730, %v1386
    %v1734 = vxor.u32 %v1733, 2147483648
    %v1735 = vmul.f32 %v1734, 1.442695
    %v1736 = vpow.pop %v1735
    %v1737 = vadd.f32 %v1736, 1.0
    %v1738 = vrcp.pop %v1737
    %v1739 = vmul.f32 %v1737, %v1738
    %v1740 = vsub.f32 1.0, %v1739
    %v1741 = vmul.f32 %v1738, %v1740
    %v1742 = vadd.f32 %v1738, %v1741
    %vm1743 = vweird.f32 %v1737
    %vm1744 = vweird.f32 %v1738
    %vm1745 = vmor %vm1743, %vm1744
    %v1746 = vsel %vm1745, %v1738, %v1742
    %v1747 = vand.u32 2147483647, %v1737
    %vm1748 = vcmp.eq.f32.partialorder %v1747, 8.507059e+37
    %v1749 = vand.u32 %v1737, 2147483648
    %v1750 = vor.u32 1.1754944e-38, %v1749
    %v1751 = vsel %vm1748, %v1750, %v1746
    %v1752 = vmul.f32 1.0, %v1751
    %v1753 = vmul.f32 %v1752, 2.0
    %v1754 = vsub.f32 %v1753, 1.0
    %v1755 = vmul.f32 %v1752, %v1600
    %1757 = vrot.lane.b32.xlu0 %v1754, 64
    %v1758 = vpop.permute.xlu0 %1757
    %v1760 = vmul.f32 %v1752, %v1758
    %1762 = vrot.lane.b32.xlu0 %v1760, 32
    %v1763 = vpop.permute.xlu0 %1762
    %v1765 = vadd.f32 %v1755, %v1763
    %v1766 = vtanh.pop %v1765
    %1768 = vrot.lane.b32.xlu0 %v1766, 64
    %v1769 = vpop.permute.xlu0 %1768
    %v1771 = vmul.f32 %v1752, %v1769
    %v1772 = vpack.c.bf16 %v1771, %v1771
    %1774 = vrot.lane.b32.xlu0 %v1772, 32
    %v1775 = vpop.permute.xlu0 %1774
    %v1777 = vsel %vm121, %v1775, 0
    %1779 = vmatpush.bf16.msra.mxu0 0
    %1780 = vmatpush.bf16.msra.mxu0 0
    %1781 = vmatpush.bf16.msra.mxu0 0
    %1782 = vmatpush.bf16.msra.mxu0 0
    %1783 = vmatpush.bf16.msra.mxu0 0
    %1784 = vmatpush.bf16.msra.mxu0 0
    %1785 = vmatpush.bf16.msra.mxu0 %v1440
    %1786 = vmatpush.bf16.msra.mxu0 %v1439
    %1787 = vmatmul.bf16.gmra.mxu0 %v1777
    %v1788 = vpop.f32.mrf.mxu0
    %v1789 = vadd.f32 %v1427, %v1788
    %v1790 = vpop.f32.mrf.mxu0
    %1791 = vdwg.mxu0
    %v1792 = vxor.u32 %v1789, 2147483648
    %v1793 = vmul.f32 %v1792, 1.442695
    %v1794 = vpow.pop %v1793
    %v1795 = vadd.f32 %v1794, 1.0
    %v1796 = vrcp.pop %v1795
    %v1797 = vmul.f32 %v1795, %v1796
    %v1798 = vsub.f32 1.0, %v1797
    %v1799 = vmul.f32 %v1796, %v1798
    %v1800 = vadd.f32 %v1796, %v1799
    %vm1801 = vweird.f32 %v1795
    %vm1802 = vweird.f32 %v1796
    %vm1803 = vmor %vm1801, %vm1802
    %v1804 = vsel %vm1803, %v1796, %v1800
    %v1805 = vand.u32 2147483647, %v1795
    %vm1806 = vcmp.eq.f32.partialorder %v1805, 8.507059e+37
    %v1807 = vand.u32 %v1795, 2147483648
    %v1808 = vor.u32 1.1754944e-38, %v1807
    %v1809 = vsel %vm1806, %v1808, %v1804
    %v1810 = vmul.f32 1.0, %v1809
    %v1811 = vmul.f32 %v1810, %v1250
    %1812 = vmatpush.bf16.msra.mxu0 0
    %1813 = vmatpush.bf16.msra.mxu0 0
    %1814 = vmatpush.bf16.msra.mxu0 0
    %1815 = vmatpush.bf16.msra.mxu0 0
    %1816 = vmatpush.bf16.msra.mxu0 0
    %1817 = vmatpush.bf16.msra.mxu0 0
    %1818 = vmatpush.bf16.msra.mxu0 %v1261
    %1819 = vmatpush.bf16.msra.mxu0 %v1260
    %1820 = vmatmul.bf16.gmra.mxu0 %v1718
    %v1821 = vpop.f32.mrf.mxu0
    %v1822 = vadd.f32 0.0, %v1821
    %v1823 = vpop.f32.mrf.mxu0
    %1824 = vdwg.mxu0
    %v1825 = vadd.f32 %v1811, %v1822
    %v1826 = vadd.f32 %v1825, %v1281
    %v1827 = vxor.u32 %v1826, 2147483648
    %v1828 = vmul.f32 %v1827, 1.442695
    %v1829 = vpow.pop %v1828
    %v1830 = vadd.f32 %v1829, 1.0
    %v1831 = vrcp.pop %v1830
    %v1832 = vmul.f32 %v1830, %v1831
    %v1833 = vsub.f32 1.0, %v1832
    %v1834 = vmul.f32 %v1831, %v1833
    %v1835 = vadd.f32 %v1831, %v1834
    %vm1836 = vweird.f32 %v1830
    %vm1837 = vweird.f32 %v1831
    %vm1838 = vmor %vm1836, %vm1837
    %v1839 = vsel %vm1838, %v1831, %v1835
    %v1840 = vand.u32 2147483647, %v1830
    %vm1841 = vcmp.eq.f32.partialorder %v1840, 8.507059e+37
    %v1842 = vand.u32 %v1830, 2147483648
    %v1843 = vor.u32 1.1754944e-38, %v1842
    %v1844 = vsel %vm1841, %v1843, %v1839
    %v1845 = vmul.f32 1.0, %v1844
    %v1846 = vmul.f32 %v1845, 2.0
    %v1847 = vsub.f32 %v1846, 1.0
    %v1848 = vmul.f32 %v1845, %v1693
    %1850 = vrot.lane.b32.xlu0 %v1847, 64
    %v1851 = vpop.permute.xlu0 %1850
    %v1853 = vmul.f32 %v1845, %v1851
    %1855 = vrot.lane.b32.xlu0 %v1853, 32
    %v1856 = vpop.permute.xlu0 %1855
    %v1858 = vadd.f32 %v1848, %v1856
    %v1859 = vtanh.pop %v1858
    %1861 = vrot.lane.b32.xlu0 %v1859, 64
    %v1862 = vpop.permute.xlu0 %1861
    %v1864 = vmul.f32 %v1845, %v1862
    %v1865 = vpack.c.bf16 %v1864, %v1864
    %1866 = vmatpush.bf16.msra.mxu0 0
    %1867 = vmatpush.bf16.msra.mxu0 0
    %1868 = vmatpush.bf16.msra.mxu0 0
    %1869 = vmatpush.bf16.msra.mxu0 0
    %1870 = vmatpush.bf16.msra.mxu0 0
    %1871 = vmatpush.bf16.msra.mxu0 0
    %1872 = vmatpush.bf16.msra.mxu0 %v1335
    %1873 = vmatpush.bf16.msra.mxu0 %v1334
    %1874 = vmatmul.bf16.gmra.mxu0 %v1777
    %v1875 = vpop.f32.mrf.mxu0
    %v1876 = vadd.f32 0.0, %v1875
    %v1877 = vpop.f32.mrf.mxu0
    %1878 = vdwg.mxu0
    %1880 = vrot.lane.b32.xlu0 %v1865, 32
    %v1881 = vpop.permute.xlu0 %1880
    %v1883 = vsel %vm121, %v1881, 0
    %1885 = vmatpush.bf16.msra.mxu0 0
    %1886 = vmatpush.bf16.msra.mxu0 0
    %1887 = vmatpush.bf16.msra.mxu0 0
    %1888 = vmatpush.bf16.msra.mxu0 0
    %1889 = vmatpush.bf16.msra.mxu0 0
    %1890 = vmatpush.bf16.msra.mxu0 0
    %1891 = vmatpush.bf16.msra.mxu0 %v1367
    %1892 = vmatpush.bf16.msra.mxu0 %v1366
    %1893 = vmatmul.bf16.gmra.mxu0 %v1883
    %v1894 = vpop.f32.mrf.mxu0
    %v1895 = vadd.f32 %v1876, %v1894
    %v1896 = vpop.f32.mrf.mxu0
    %1897 = vdwg.mxu0
    %v1898 = vadd.f32 %v1895, %v1386
    %v1899 = vxor.u32 %v1898, 2147483648
    %v1900 = vmul.f32 %v1899, 1.442695
    %v1901 = vpow.pop %v1900
    %v1902 = vadd.f32 %v1901, 1.0
    %v1903 = vrcp.pop %v1902
    %v1904 = vmul.f32 %v1902, %v1903
    %v1905 = vsub.f32 1.0, %v1904
    %v1906 = vmul.f32 %v1903, %v1905
    %v1907 = vadd.f32 %v1903, %v1906
    %vm1908 = vweird.f32 %v1902
    %vm1909 = vweird.f32 %v1903
    %vm1910 = vmor %vm1908, %vm1909
    %v1911 = vsel %vm1910, %v1903, %v1907
    %v1912 = vand.u32 2147483647, %v1902
    %vm1913 = vcmp.eq.f32.partialorder %v1912, 8.507059e+37
    %v1914 = vand.u32 %v1902, 2147483648
    %v1915 = vor.u32 1.1754944e-38, %v1914
    %v1916 = vsel %vm1913, %v1915, %v1911
    %v1917 = vmul.f32 1.0, %v1916
    %v1918 = vmul.f32 %v1917, 2.0
    %v1919 = vsub.f32 %v1918, 1.0
    %v1920 = vmul.f32 %v1917, %v1765
    %1922 = vrot.lane.b32.xlu0 %v1919, 64
    %v1923 = vpop.permute.xlu0 %1922
    %v1925 = vmul.f32 %v1917, %v1923
    %1927 = vrot.lane.b32.xlu0 %v1925, 32
    %v1928 = vpop.permute.xlu0 %1927
    %v1930 = vadd.f32 %v1920, %v1928
    %v1931 = vtanh.pop %v1930
    %1933 = vrot.lane.b32.xlu0 %v1931, 64
    %v1934 = vpop.permute.xlu0 %1933
    %v1936 = vmul.f32 %v1917, %v1934
    %v1937 = vpack.c.bf16 %v1936, %v1936
    %1939 = vrot.lane.b32.xlu0 %v1937, 32
    %v1940 = vpop.permute.xlu0 %1939
    %v1942 = vsel %vm121, %v1940, 0
    %1944 = vmatpush.bf16.msra.mxu0 0
    %1945 = vmatpush.bf16.msra.mxu0 0
    %1946 = vmatpush.bf16.msra.mxu0 0
    %1947 = vmatpush.bf16.msra.mxu0 0
    %1948 = vmatpush.bf16.msra.mxu0 0
    %1949 = vmatpush.bf16.msra.mxu0 0
    %1950 = vmatpush.bf16.msra.mxu0 %v1440
    %1951 = vmatpush.bf16.msra.mxu0 %v1439
    %1952 = vmatmul.bf16.gmra.mxu0 %v1942
    %v1953 = vpop.f32.mrf.mxu0
    %v1954 = vadd.f32 %v1427, %v1953
    %v1955 = vpop.f32.mrf.mxu0
    %1956 = vdwg.mxu0
    %v1957 = vxor.u32 %v1954, 2147483648
    %v1958 = vmul.f32 %v1957, 1.442695
    %v1959 = vpow.pop %v1958
    %v1960 = vadd.f32 %v1959, 1.0
    %v1961 = vrcp.pop %v1960
    %v1962 = vmul.f32 %v1960, %v1961
    %v1963 = vsub.f32 1.0, %v1962
    %v1964 = vmul.f32 %v1961, %v1963
    %v1965 = vadd.f32 %v1961, %v1964
    %vm1966 = vweird.f32 %v1960
    %vm1967 = vweird.f32 %v1961
    %vm1968 = vmor %vm1966, %vm1967
    %v1969 = vsel %vm1968, %v1961, %v1965
    %v1970 = vand.u32 2147483647, %v1960
    %vm1971 = vcmp.eq.f32.partialorder %v1970, 8.507059e+37
    %v1972 = vand.u32 %v1960, 2147483648
    %v1973 = vor.u32 1.1754944e-38, %v1972
    %v1974 = vsel %vm1971, %v1973, %v1969
    %v1975 = vmul.f32 1.0, %v1974
    %1977 = vrot.lane.b32.xlu0 %v1645, 1
    %v1978 = vpop.permute.xlu0 %1977
    %1981 = vrot.lane.b32.xlu0 %v1810, 2
    %v1982 = vpop.permute.xlu0 %1981
    %1985 = vrot.lane.b32.xlu0 %v1975, 3
    %v1986 = vpop.permute.xlu0 %1985
    %vm1988 = vcmask 7168
    %v1989 = vsel %vm1988, %v1477, %v1978
    %vm1990 = vcmask 15360
    %v1991 = vsel %vm1990, %v1989, %v1982
    %vm1992 = vcmask 23552
    %v1993 = vsel %vm1992, %v1991, %v1986
    %vm1994 = vcmask 25600
    %1995 = vst.msk [vmem:[#allocation7] sm:$0x3] %vm1994, %v1993
    // Predicated region
    $region30: #{tpu_custom_call.1} parent=1 // pred_check
      _
    $region31: #{tpu_custom_call.1} parent=1 // pred_check_branch
      %1997 = sbr.rel (0) target = $region33
    $region32: #{tpu_custom_call.1} parent=1 // pred_region
      %1999 = vsyncadd [#allocation4], 0
      %s2001 = sshll.u32 [#allocation7], 4
      %s2002 = int_to_ptr.vmem [resolvable:$true] %s2001
      %s2003 = sshll.u32 %s5, 4
      %s2004 = int_to_ptr.hbm [resolvable:$true] %s2003
      %2006 = dma.vmem_to_hbm [thread:$0]  %s2002, 32, %s2004, [#allocation4]
    $region33: #{tpu_custom_call.1} parent=1 // pred_fallthru
      _
    // Predicated region
    $region34: #{tpu_custom_call.1} parent=1 // pred_check
      _
    $region35: #{tpu_custom_call.1} parent=1 // pred_check_branch
      %2008 = sbr.rel (0) target = $region37
    $region36: #{tpu_custom_call.1} parent=1 // pred_region
      %2010 = dma.done [#allocation4], 32
    $region37: #{tpu_custom_call.1} parent=1 // pred_fallthru
      _
    %2011 = vsyncpa [#allocation3], 1
    %2012 = vsyncpa [#allocation6], 1
    %2013 = vsyncpa [#allocation4], 1

</llo_original>
